<compile_context>
chip_gen: v7x
topology: tpu7x:2x2x1
jax: 0.10.0
libtpu: 0.0.40
codegen_flags: <defaults>
</compile_context>

<pallas_src>
import functools

import jax
import jax.numpy as jnp
from jax.experimental import pallas as pl
from jax.experimental.pallas import tpu as pltpu


# ------------------------------ Pallas kernel ------------------------------ #

def _vat_fused_kernel(x_ref, d_ref, w_ref, wt_ref, b_ref,
                      radv_ref, loss_ref,
                      *, xi, epsilon, n_power, inv_n_elems,
                      m_true, k_true, tile_m):
    i = pl.program_id(0)

    x = x_ref[...]
    w = w_ref[...]
    wt = wt_ref[...]

    # ---- with torch.no_grad(): onset_ref = model(x) ----
    # Hoisted invariant logits; every perturbed forward reuses them as
    # (x + r) @ W + b == z0 + r @ W  (one matmul per power step instead of
    # two, and the tiny perturbation is not swamped by x before the matmul).
    z0 = jnp.dot(x, w, preferred_element_type=jnp.float32) + b_ref[...]
    ref = jax.nn.sigmoid(z0)

    # ---- power iterations: d <- grad_d BCE(model(x + XI*l2norm(d)), ref) ----
    d = d_ref[...]
    for _ in range(n_power):
        nsq = jnp.sum(d * d, axis=-1, keepdims=True)
        inv_norm = jax.lax.rsqrt(nsq)                 # EUP rsqrt, no VALU divide
        dn = d * inv_norm                             # _l2_normalize(d), binwise=False
        dz = jnp.dot(dn, w, preferred_element_type=jnp.float32)
        p = jax.nn.sigmoid(z0 + xi * dz)              # model(x + XI*dn)
        gz = (p - ref) * inv_n_elems                  # d(mean BCE)/dz (sigmoid+BCE fused)
        gr = jnp.dot(gz, wt, preferred_element_type=jnp.float32)   # gz @ W^T (pre-transposed)
        # backprop through r = XI * d / ||d||
        inner = jnp.sum(gr * d, axis=-1, keepdims=True)
        d = xi * (gr * inv_norm - d * (inner * inv_norm * inv_norm * inv_norm))

    # ---- r_adv = epsilon * l2norm(d) ----
    nsq = jnp.sum(d * d, axis=-1, keepdims=True)
    r_adv = (epsilon * jax.lax.rsqrt(nsq)) * d
    radv_ref[...] = r_adv

    # ---- vat_loss = mean BCE(model(x + r_adv), onset_ref): per-tile partial sum ----
    z = z0 + jnp.dot(r_adv, w, preferred_element_type=jnp.float32)
    p = jax.nn.sigmoid(z)
    log_p = jnp.maximum(jnp.log(p), -100.0)           # F.binary_cross_entropy clamp
    log_1mp = jnp.maximum(jnp.log(1.0 - p), -100.0)
    bce = -(ref * log_p + (1.0 - ref) * log_1mp)

    rows = i * tile_m + jax.lax.broadcasted_iota(jnp.int32, bce.shape, 0)
    cols = jax.lax.broadcasted_iota(jnp.int32, bce.shape, 1)
    part = jnp.sum(jnp.where((rows < m_true) & (cols < k_true), bce, 0.0))

    # Lane-aligned (8,128) partial-loss block: element [0,0] holds this tile's
    # BCE sum, everything else is zero, so the wrapper can simply jnp.sum it.
    rr = jax.lax.broadcasted_iota(jnp.int32, (8, 128), 0)
    cc = jax.lax.broadcasted_iota(jnp.int32, (8, 128), 1)
    loss_ref[...] = jnp.where((rr == 0) & (cc == 0), part, 0.0)


# ------------------------------ JAX wrapper -------------------------------- #

def _round_up(v, m):
    return ((v + m - 1) // m) * m


def stepwise_vat_onset_stack(x, w, b, key, xi, epsilon, n_power, tile_m=128):
    """Forward pass of stepwise_VAT_onset_stack. Returns (vat_loss, r_adv)."""
    bsz, t, f = x.shape
    k = w.shape[1]
    m = bsz * t
    x2d = x.reshape(m, f).astype(jnp.float32)

    # d = torch.randn_like(x)
    d2d = jax.random.normal(key, (m, f), dtype=jnp.float32)

    # Lane/sublane padding: feature & output dims to multiples of 128 (dense
    # unmasked vector loads/stores), rows to a multiple of the M-tile.
    fp = _round_up(f, 128)
    kp = _round_up(k, 128)
    tm = min(tile_m, _round_up(m, 8))
    mp = _round_up(m, tm)
    num_tiles = mp // tm

    xp = jnp.pad(x2d, ((0, mp - m), (0, fp - f)))
    dp = jnp.pad(d2d, ((0, 0), (0, fp - f)))
    dp = jnp.pad(dp, ((0, mp - m), (0, 0)), constant_values=1.0)  # padded rows avoid 0/0
    wp = jnp.pad(w.astype(jnp.float32), ((0, fp - f), (0, kp - k)))
    wtp = wp.T  # pre-transposed: gz @ W^T becomes a canonical MXU matmul (no in-kernel transpose)
    bp = jnp.pad(b.reshape(1, k).astype(jnp.float32), ((0, 0), (0, kp - k)))

    n_elems = float(m * k)  # true element count of the BCE mean (padding excluded)

    kern = functools.partial(
        _vat_fused_kernel,
        xi=float(xi), epsilon=float(epsilon), n_power=int(n_power),
        inv_n_elems=1.0 / n_elems, m_true=m, k_true=k, tile_m=tm)

    radv_p, loss_parts = pl.pallas_call(
        kern,
        out_shape=(
            jax.ShapeDtypeStruct((mp, fp), jnp.float32),              # r_adv (padded)
            jax.ShapeDtypeStruct((num_tiles * 8, 128), jnp.float32),  # per-tile BCE partial sums
        ),
        grid=(num_tiles,),
        in_specs=[
            pl.BlockSpec((tm, fp), lambda i: (i, 0)),   # x tile
            pl.BlockSpec((tm, fp), lambda i: (i, 0)),   # d tile
            pl.BlockSpec((fp, kp), lambda i: (0, 0)),   # W   (resident across tiles)
            pl.BlockSpec((kp, fp), lambda i: (0, 0)),   # W^T (resident across tiles)
            pl.BlockSpec((1, kp), lambda i: (0, 0)),    # b   (resident across tiles)
        ],
        out_specs=(
            pl.BlockSpec((tm, fp), lambda i: (i, 0)),
            pl.BlockSpec((8, 128), lambda i: (i, 0)),
        ),
        compiler_params=pltpu.CompilerParams(
            dimension_semantics=("parallel",),          # tiles independent -> megacore on v7x
            vmem_limit_bytes=32 * 1024 * 1024,          # safe on v5e/v6e/v7x; footprint is tiny
        ),
    )(xp, dp, wp, wtp, bp)

    vat_loss = jnp.sum(loss_parts) / n_elems
    r_adv = radv_p[:m, :f].reshape(bsz, t, f)
    return vat_loss, r_adv


# --------------------------------- driver ---------------------------------- #

if __name__ == "__main__":
    key = jax.random.PRNGKey(0)
    kx, kw, kd = jax.random.split(key, 3)

    # Small shapes consistent with an onset stack: (batch, time, features).
    B, T, F_IN, K_OUT = 2, 128, 32, 32
    x = jax.random.normal(kx, (B, T, F_IN), dtype=jnp.float32)

    # Deterministic synthetic onset-head parameters (linear + sigmoid).
    w = 0.1 * jax.random.normal(kw, (F_IN, K_OUT), dtype=jnp.float32)
    b = jnp.zeros((1, K_OUT), dtype=jnp.float32)

    # XI=1e-3 keeps the power-iteration gradient comfortably inside the f32
    # normal range for this small synthetic head (the reference's asserts
    # exist precisely because a badly tuned XI under/overflows).
    XI = 1e-3
    EPSILON = 1.0
    N_POWER = 1

    vat_loss, r_adv = stepwise_vat_onset_stack(x, w, b, kd, XI, EPSILON, N_POWER)
    jax.block_until_ready((vat_loss, r_adv))

    assert not bool(jnp.isnan(r_adv).any()), \
        'r_adv exploded, please debug tune down the XI for VAT'
    assert not bool(jnp.isinf(r_adv).any()), \
        'r_adv vanished, please debug tune up the XI for VAT'
    assert not bool(jnp.isnan(vat_loss)), 'vat_loss is nan, please debug'

    print("KERNEL_OK")
</pallas_src>

<mosaic_0001>
module attributes {stable_mosaic.version = 11 : i64} {
  func.func @_vat_fused_kernel(%arg0: i32, %arg1: memref<128x128xf32, #tpu.memory_space<vmem>>, %arg2: memref<128x128xf32, #tpu.memory_space<vmem>>, %arg3: memref<128x128xf32, #tpu.memory_space<vmem>>, %arg4: memref<128x128xf32, #tpu.memory_space<vmem>>, %arg5: memref<1x128xf32, #tpu.memory_space<vmem>>, %arg6: memref<128x128xf32, #tpu.memory_space<vmem>>, %arg7: memref<8x128xf32, #tpu.memory_space<vmem>>) attributes {dimension_semantics = [#tpu.dimension_semantics<parallel>], iteration_bounds = array<i64: 2>, scalar_prefetch = 0 : i64, scratch_operands = 0 : i64, tpu.core_type = #tpu.core_type<tc>, window_params = [{transform_indices = @transform_0, window_bounds = array<i64: 128, 128>}, {transform_indices = @transform_1, window_bounds = array<i64: 128, 128>}, {pipeline_mode = #tpu.pipeline_mode<synchronous>, transform_indices = @transform_2, window_bounds = array<i64: 128, 128>}, {pipeline_mode = #tpu.pipeline_mode<synchronous>, transform_indices = @transform_3, window_bounds = array<i64: 128, 128>}, {pipeline_mode = #tpu.pipeline_mode<synchronous>, transform_indices = @transform_4, window_bounds = array<i64: 1, 128>}, {transform_indices = @transform_5, window_bounds = array<i64: 128, 128>}, {transform_indices = @transform_6, window_bounds = array<i64: 8, 128>}]} {
    %c0 = arith.constant 0 : index
    %c0_0 = arith.constant 0 : index
    %0 = vector.load %arg1[%c0, %c0_0] : memref<128x128xf32, #tpu.memory_space<vmem>>, vector<128x128xf32>
    %c0_1 = arith.constant 0 : index
    %c0_2 = arith.constant 0 : index
    %1 = vector.load %arg3[%c0_1, %c0_2] : memref<128x128xf32, #tpu.memory_space<vmem>>, vector<128x128xf32>
    %c0_3 = arith.constant 0 : index
    %c0_4 = arith.constant 0 : index
    %2 = vector.load %arg4[%c0_3, %c0_4] : memref<128x128xf32, #tpu.memory_space<vmem>>, vector<128x128xf32>
    %cst = arith.constant dense<0.000000e+00> : vector<128x128xf32>
    %3 = tpu.matmul %0, %1, %cst {dimension_numbers = #tpu.dot_dimension_numbers<[1], [0], [0], [1], [0, 0, 1, 1], [], []>} : vector<128x128xf32>, vector<128x128xf32>, vector<128x128xf32> -> vector<128x128xf32>
    %c0_5 = arith.constant 0 : index
    %c0_6 = arith.constant 0 : index
    %4 = vector.load %arg5[%c0_5, %c0_6] : memref<1x128xf32, #tpu.memory_space<vmem>>, vector<1x128xf32>
    %5 = vector.broadcast %4 : vector<1x128xf32> to vector<128x128xf32>
    %6 = arith.addf %3, %5 : vector<128x128xf32>
    %7 = arith.negf %6 : vector<128x128xf32>
    %8 = math.exp %7 : vector<128x128xf32>
    %cst_7 = arith.constant 1.000000e+00 : f32
    %9 = vector.broadcast %cst_7 : f32 to vector<128x128xf32>
    %10 = arith.addf %9, %8 : vector<128x128xf32>
    %11 = arith.divf %9, %10 : vector<128x128xf32>
    %c0_8 = arith.constant 0 : index
    %c0_9 = arith.constant 0 : index
    %12 = vector.load %arg2[%c0_8, %c0_9] : memref<128x128xf32, #tpu.memory_space<vmem>>, vector<128x128xf32>
    %13 = arith.mulf %12, %12 : vector<128x128xf32>
    %cst_10 = arith.constant dense<0.000000e+00> : vector<128xf32>
    %14 = vector.multi_reduction <add>, %13, %cst_10 [1] : vector<128x128xf32> to vector<128xf32>
    %15 = vector.shape_cast %14 : vector<128xf32> to vector<128x1xf32>
    %16 = math.rsqrt %15 : vector<128x1xf32>
    %17 = vector.broadcast %16 : vector<128x1xf32> to vector<128x128xf32>
    %18 = arith.mulf %12, %17 : vector<128x128xf32>
    %cst_11 = arith.constant dense<0.000000e+00> : vector<128x128xf32>
    %19 = tpu.matmul %18, %1, %cst_11 {dimension_numbers = #tpu.dot_dimension_numbers<[1], [0], [0], [1], [0, 0, 1, 1], [], []>} : vector<128x128xf32>, vector<128x128xf32>, vector<128x128xf32> -> vector<128x128xf32>
    %cst_12 = arith.constant 1.000000e-03 : f32
    %20 = vector.broadcast %cst_12 : f32 to vector<128x128xf32>
    %21 = arith.mulf %20, %19 : vector<128x128xf32>
    %22 = arith.addf %6, %21 : vector<128x128xf32>
    %23 = arith.negf %22 : vector<128x128xf32>
    %24 = math.exp %23 : vector<128x128xf32>
    %cst_13 = arith.constant 1.000000e+00 : f32
    %25 = vector.broadcast %cst_13 : f32 to vector<128x128xf32>
    %26 = arith.addf %25, %24 : vector<128x128xf32>
    %27 = arith.divf %25, %26 : vector<128x128xf32>
    %28 = arith.subf %27, %11 : vector<128x128xf32>
    %cst_14 = arith.constant 1.22070313E-4 : f32
    %29 = vector.broadcast %cst_14 : f32 to vector<128x128xf32>
    %30 = arith.mulf %28, %29 : vector<128x128xf32>
    %cst_15 = arith.constant dense<0.000000e+00> : vector<128x128xf32>
    %31 = tpu.matmul %30, %2, %cst_15 {dimension_numbers = #tpu.dot_dimension_numbers<[1], [0], [0], [1], [0, 0, 1, 1], [], []>} : vector<128x128xf32>, vector<128x128xf32>, vector<128x128xf32> -> vector<128x128xf32>
    %32 = arith.mulf %31, %12 : vector<128x128xf32>
    %cst_16 = arith.constant dense<0.000000e+00> : vector<128xf32>
    %33 = vector.multi_reduction <add>, %32, %cst_16 [1] : vector<128x128xf32> to vector<128xf32>
    %34 = vector.shape_cast %33 : vector<128xf32> to vector<128x1xf32>
    %35 = vector.broadcast %16 : vector<128x1xf32> to vector<128x128xf32>
    %36 = arith.mulf %31, %35 : vector<128x128xf32>
    %37 = arith.mulf %34, %16 : vector<128x1xf32>
    %38 = arith.mulf %37, %16 : vector<128x1xf32>
    %39 = arith.mulf %38, %16 : vector<128x1xf32>
    %40 = vector.broadcast %39 : vector<128x1xf32> to vector<128x128xf32>
    %41 = arith.mulf %12, %40 : vector<128x128xf32>
    %42 = arith.subf %36, %41 : vector<128x128xf32>
    %cst_17 = arith.constant 1.000000e-03 : f32
    %43 = vector.broadcast %cst_17 : f32 to vector<128x128xf32>
    %44 = arith.mulf %43, %42 : vector<128x128xf32>
    %45 = arith.mulf %44, %44 : vector<128x128xf32>
    %cst_18 = arith.constant dense<0.000000e+00> : vector<128xf32>
    %46 = vector.multi_reduction <add>, %45, %cst_18 [1] : vector<128x128xf32> to vector<128xf32>
    %47 = vector.shape_cast %46 : vector<128xf32> to vector<128x1xf32>
    %48 = math.rsqrt %47 : vector<128x1xf32>
    %cst_19 = arith.constant 1.000000e+00 : f32
    %49 = vector.broadcast %cst_19 : f32 to vector<128x1xf32>
    %50 = arith.mulf %49, %48 : vector<128x1xf32>
    %51 = vector.broadcast %50 : vector<128x1xf32> to vector<128x128xf32>
    %52 = arith.mulf %51, %44 : vector<128x128xf32>
    %c0_20 = arith.constant 0 : index
    %c0_21 = arith.constant 0 : index
    %53 = vector.load %arg6[%c0_20, %c0_21] : memref<128x128xf32, #tpu.memory_space<vmem>>, vector<128x128xf32>
    tpu.vector_store %arg6[%c0_20, %c0_21], %52 {strides = array<i32>} : memref<128x128xf32, #tpu.memory_space<vmem>>, vector<128x128xf32>,
    %cst_22 = arith.constant dense<0.000000e+00> : vector<128x128xf32>
    %54 = tpu.matmul %52, %1, %cst_22 {dimension_numbers = #tpu.dot_dimension_numbers<[1], [0], [0], [1], [0, 0, 1, 1], [], []>} : vector<128x128xf32>, vector<128x128xf32>, vector<128x128xf32> -> vector<128x128xf32>
    %55 = arith.addf %6, %54 : vector<128x128xf32>
    %56 = arith.negf %55 : vector<128x128xf32>
    %57 = math.exp %56 : vector<128x128xf32>
    %cst_23 = arith.constant 1.000000e+00 : f32
    %58 = vector.broadcast %cst_23 : f32 to vector<128x128xf32>
    %59 = arith.addf %58, %57 : vector<128x128xf32>
    %60 = arith.divf %58, %59 : vector<128x128xf32>
    %61 = math.log %60 : vector<128x128xf32>
    %cst_24 = arith.constant -1.000000e+02 : f32
    %62 = vector.broadcast %cst_24 : f32 to vector<128x128xf32>
    %63 = arith.maximumf %61, %62 : vector<128x128xf32>
    %cst_25 = arith.constant 1.000000e+00 : f32
    %64 = vector.broadcast %cst_25 : f32 to vector<128x128xf32>
    %65 = arith.subf %64, %60 : vector<128x128xf32>
    %66 = math.log %65 : vector<128x128xf32>
    %cst_26 = arith.constant -1.000000e+02 : f32
    %67 = vector.broadcast %cst_26 : f32 to vector<128x128xf32>
    %68 = arith.maximumf %66, %67 : vector<128x128xf32>
    %69 = arith.mulf %11, %63 : vector<128x128xf32>
    %cst_27 = arith.constant 1.000000e+00 : f32
    %70 = vector.broadcast %cst_27 : f32 to vector<128x128xf32>
    %71 = arith.subf %70, %11 : vector<128x128xf32>
    %72 = arith.mulf %71, %68 : vector<128x128xf32>
    %73 = arith.addf %69, %72 : vector<128x128xf32>
    %cst_28 = arith.constant 0.000000e+00 : f32
    %74 = vector.broadcast %cst_28 : f32 to vector<128x128xf32>
    %75 = arith.subf %74, %73 : vector<128x128xf32>
    %c128_i32 = arith.constant 128 : i32
    %76 = arith.muli %arg0, %c128_i32 : i32
    %77 = tpu.iota {dimensions = array<i32: 0>} : vector<128x128xi32>
    %78 = vector.broadcast %76 : i32 to vector<128x128xi32>
    %79 = arith.addi %78, %77 : vector<128x128xi32>
    %80 = tpu.iota {dimensions = array<i32: 1>} : vector<128x128xi32>
    %c256_i32 = arith.constant 256 : i32
    %81 = vector.broadcast %c256_i32 : i32 to vector<128x128xi32>
    %82 = arith.cmpi slt, %79, %81 : vector<128x128xi32>
    %c32_i32 = arith.constant 32 : i32
    %83 = vector.broadcast %c32_i32 : i32 to vector<128x128xi32>
    %84 = arith.cmpi slt, %80, %83 : vector<128x128xi32>
    %85 = arith.andi %82, %84 : vector<128x128xi1>
    %cst_29 = arith.constant 0.000000e+00 : f32
    %86 = vector.broadcast %cst_29 : f32 to vector<128x128xf32>
    %87 = arith.select %85, %75, %86 : vector<128x128xi1>, vector<128x128xf32>
    %88 = vector.shape_cast %87 : vector<128x128xf32> to vector<1x128x128xf32>
    %cst_30 = arith.constant dense<0.000000e+00> : vector<1xf32>
    %89 = vector.multi_reduction <add>, %88, %cst_30 [1, 2] : vector<1x128x128xf32> to vector<1xf32>
    %90 = vector.shape_cast %89 : vector<1xf32> to vector<1x1x1xf32>
    %91 = vector.extract %90[0, 0, 0] : f32 from vector<1x1x1xf32>
    %92 = tpu.iota {dimensions = array<i32: 0>} : vector<8x128xi32>
    %93 = tpu.iota {dimensions = array<i32: 1>} : vector<8x128xi32>
    %c0_i32 = arith.constant 0 : i32
    %94 = vector.broadcast %c0_i32 : i32 to vector<8x128xi32>
    %95 = arith.cmpi eq, %92, %94 : vector<8x128xi32>
    %c0_i32_31 = arith.constant 0 : i32
    %96 = vector.broadcast %c0_i32_31 : i32 to vector<8x128xi32>
    %97 = arith.cmpi eq, %93, %96 : vector<8x128xi32>
    %98 = arith.andi %95, %97 : vector<8x128xi1>
    %cst_32 = arith.constant 0.000000e+00 : f32
    %99 = vector.broadcast %91 : f32 to vector<8x128xf32>
    %100 = vector.broadcast %cst_32 : f32 to vector<8x128xf32>
    %101 = arith.select %98, %99, %100 : vector<8x128xi1>, vector<8x128xf32>
    %c0_33 = arith.constant 0 : index
    %c0_34 = arith.constant 0 : index
    %102 = vector.load %arg7[%c0_33, %c0_34] : memref<8x128xf32, #tpu.memory_space<vmem>>, vector<8x128xf32>
    tpu.vector_store %arg7[%c0_33, %c0_34], %101 {strides = array<i32>} : memref<8x128xf32, #tpu.memory_space<vmem>>, vector<8x128xf32>,
    return
  }
  func.func @transform_0(%arg0: i32) -> (i32, i32) {
    %c0_i32 = arith.constant 0 : i32
    %c0_i32_0 = arith.constant 0 : i32
    return %arg0, %c0_i32 : i32, i32
  }
  func.func @transform_1(%arg0: i32) -> (i32, i32) {
    %c0_i32 = arith.constant 0 : i32
    %c0_i32_0 = arith.constant 0 : i32
    return %arg0, %c0_i32 : i32, i32
  }
  func.func @transform_2(%arg0: i32) -> (i32, i32) {
    %c0_i32 = arith.constant 0 : i32
    %c0_i32_0 = arith.constant 0 : i32
    %c0_i32_1 = arith.constant 0 : i32
    return %c0_i32, %c0_i32_0 : i32, i32
  }
  func.func @transform_3(%arg0: i32) -> (i32, i32) {
    %c0_i32 = arith.constant 0 : i32
    %c0_i32_0 = arith.constant 0 : i32
    %c0_i32_1 = arith.constant 0 : i32
    return %c0_i32, %c0_i32_0 : i32, i32
  }
  func.func @transform_4(%arg0: i32) -> (i32, i32) {
    %c0_i32 = arith.constant 0 : i32
    %c0_i32_0 = arith.constant 0 : i32
    %c0_i32_1 = arith.constant 0 : i32
    return %c0_i32, %c0_i32_0 : i32, i32
  }
  func.func @transform_5(%arg0: i32) -> (i32, i32) {
    %c0_i32 = arith.constant 0 : i32
    %c0_i32_0 = arith.constant 0 : i32
    return %arg0, %c0_i32 : i32, i32
  }
  func.func @transform_6(%arg0: i32) -> (i32, i32) {
    %c0_i32 = arith.constant 0 : i32
    %c0_i32_0 = arith.constant 0 : i32
    return %arg0, %c0_i32 : i32, i32
  }
}

</mosaic_0001>

<llo_original>
// kernel: tpu_custom_call.1
$region0: #{tpu_custom_call.1}
  #allocation0 [shape = 'u32[]', space=smem, size = 0x4, offset = 0x4, fixed_abs, tag = 'smem constant byte address 0x4 - core index']
  #allocation1 [shape = 'u32[144,128]{1,0:T(1,128)}', space=vmem, size = 0x12000, scoped, tag = 'internal scratch']
  %s0 = inlined_call_operand.hbm [shape: f32[256,128], index: 0, kind: input, shape index: {}]
  %s1 = inlined_call_operand.hbm [shape: f32[256,128], index: 1, kind: input, shape index: {}]
  %s2 = inlined_call_operand.hbm [shape: f32[128,128], index: 2, kind: input, shape index: {}]
  %s3 = inlined_call_operand.hbm [shape: f32[128,128], index: 3, kind: input, shape index: {}]
  %s4 = inlined_call_operand.vmem [shape: f32[1,128], index: 4, kind: input, shape index: {}]
  %s5 = inlined_call_operand.hbm [shape: f32[256,128], index: 5, kind: output, shape index: {0}]
  %s6 = inlined_call_operand.hbm [shape: f32[16,128], index: 6, kind: output, shape index: {1}]
  %7 = xla_tuple %s5, %s6
  %s8 = sld [smem:[#allocation0]]
  $region77: #{tpu_custom_call.1} parent=0
    _
  %s10 = ssub.s32 1, %s8
  %s11 = scalar_select 0, %s10, %s8
  $region1: #{tpu_custom_call.1} parent=0
    #allocation2 [shape = 'u8[131072]{0}', space=vmem, size = 0x20000, scoped, tag = 'input window, operand 0']
    #allocation3 [shape = 's32[2]{0}', space=sflag, size = 0x8, scoped, tag = 'scoped memory for tpu_custom_call.1']
    #allocation4 [shape = 's32[2]{0}', space=sflag, size = 0x8, scoped, tag = 'scoped memory for tpu_custom_call.1']
    #allocation5 [shape = 'u8[131072]{0}', space=vmem, size = 0x20000, scoped, tag = 'input window, operand 1']
    #allocation6 [shape = 's32[2]{0}', space=sflag, size = 0x8, scoped, tag = 'scoped memory for tpu_custom_call.1']
    #allocation7 [shape = 'u8[65536]{0}', space=vmem, size = 0x10000, scoped, tag = 'input window, operand 2, single buffered']
    #allocation8 [shape = 'u8[65536]{0}', space=vmem, size = 0x10000, scoped, tag = 'input window, operand 3, single buffered']
    #allocation9 [shape = 's32[1]{0}', space=sflag, size = 0x4, scoped, tag = 'scoped memory for tpu_custom_call.1']
    #allocation10 [shape = 'u8[131072]{0}', space=vmem, size = 0x20000, scoped, tag = 'output window, operand 0']
    #allocation11 [shape = 'u8[8192]{0}', space=vmem, size = 0x2000, scoped, tag = 'output window, operand 1']
    #allocation12 [shape = 's32[2]{0}', space=sflag, size = 0x8, scoped, tag = 'scoped memory for tpu_custom_call.1']
    %12 = vsyncpa [#allocation3], 0
    %s13 = scalar_lea.sflag [#allocation3], 1
    %14 = vsyncpa %s13, 0
    %15 = vsyncpa [#allocation6], 0
    %s16 = scalar_lea.sflag [#allocation6], 1
    %17 = vsyncpa %s16, 0
    %18 = vsyncpa [#allocation9], 0
    %19 = vsyncpa [#allocation4], 0
    %s20 = scalar_lea.sflag [#allocation4], 1
    %21 = vsyncpa %s20, 0
    %22 = vsyncpa [#allocation12], 0
    %s23 = scalar_lea.sflag [#allocation12], 1
    %24 = vsyncpa %s23, 0
    loop: start=0, step=1, limit=4
    $region2: #{tpu_custom_call.1} parent=1 // loop_pre_header
      _
    $region3: #{tpu_custom_call.1} parent=1 // loop_header
      %s26 = sphi 0, %s30
      %p27 = scmp.ge.s32.totalorder %s26, 4
      %s36 = sphi 0, %s38
      %s39 = sphi 0, %s36
      %s40 = sphi 0, %s39
      %s56 = sphi 0, %s40
      %s62 = sphi 0, %s64
      %s65 = sphi 0, %s62
      %s66 = sphi 0, %s65
      %s82 = sphi 0, %s66
      %s86 = sphi 0, %s86
      %s88 = sphi 0, %s86
      %s89 = sphi 0, %s88
      %s103 = sphi 0, %s89
      %s107 = sphi 0, %s107
      %s109 = sphi 0, %s107
      %s110 = sphi 0, %s109
      %s124 = sphi 0, %s110
      %s128 = sphi 0, %s128
      %s130 = sphi 0, %s128
      %s131 = sphi 0, %s130
      %s145 = sphi 0, %s131
      %s151 = sphi 0, %s153
      %s154 = sphi 0, %s151
      %s155 = sphi 0, %s154
      %s171 = sphi 0, %s155
      %s177 = sphi 0, %s179
      %s180 = sphi 0, %s177
      %s181 = sphi 0, %s180
      %s197 = sphi 0, %s181
    $region4: #{tpu_custom_call.1} parent=1 // loop_header_branch
      %29 = sbr.rel (%p27) target = $region8
    $region5: #{tpu_custom_call.1} parent=1 // loop_body
      %s31 = ssub.s32 %s26, 1
      %s32 = ssub.s32 %s26, 2
      %s33 = sadd.s32 %s26, 1
      %s34 = ssub.s32 %s26, %s33
      %p35 = scmp.eq.s32.totalorder %s34, 0
      %s37 = sadd.s32 %s36, 1
      %s38 = scalar_select %p35, %s36, %s37
      %p41 = pneg %p35
      %p42 = scmp.eq.s32.totalorder %s26, 1
      %p43 = por %p41, %p42
      %p44 = scmp.ne.s32.totalorder %s36, %s39
      %p45 = scmp.eq.s32.totalorder %s26, 0
      %p46 = por %p44, %p45
      %p47 = scmp.ne.s32.totalorder %s36, %s39
      %p48 = scmp.eq.s32.totalorder %s31, 1
      %p49 = por %p47, %p48
      %p50 = scmp.ne.s32.totalorder %s39, %s40
      %p51 = scmp.eq.s32.totalorder %s31, 0
      %p52 = por %p50, %p51
      %p53 = scmp.ne.s32.totalorder %s39, %s40
      %p54 = scmp.eq.s32.totalorder %s32, 1
      %p55 = por %p53, %p54
      %p57 = scmp.ne.s32.totalorder %s40, %s56
      %p58 = scmp.eq.s32.totalorder %s32, 0
      %p59 = por %p57, %p58
      %s60 = ssub.s32 %s26, %s33
      %p61 = scmp.eq.s32.totalorder %s60, 0
      %s63 = sadd.s32 %s62, 1
      %s64 = scalar_select %p61, %s62, %s63
      %p67 = pneg %p61
      %p68 = scmp.eq.s32.totalorder %s26, 1
      %p69 = por %p67, %p68
      %p70 = scmp.ne.s32.totalorder %s62, %s65
      %p71 = scmp.eq.s32.totalorder %s26, 0
      %p72 = por %p70, %p71
      %p73 = scmp.ne.s32.totalorder %s62, %s65
      %p74 = scmp.eq.s32.totalorder %s31, 1
      %p75 = por %p73, %p74
      %p76 = scmp.ne.s32.totalorder %s65, %s66
      %p77 = scmp.eq.s32.totalorder %s31, 0
      %p78 = por %p76, %p77
      %p79 = scmp.ne.s32.totalorder %s65, %s66
      %p80 = scmp.eq.s32.totalorder %s32, 1
      %p81 = por %p79, %p80
      %p83 = scmp.ne.s32.totalorder %s66, %s82
      %p84 = scmp.eq.s32.totalorder %s32, 0
      %p85 = por %p83, %p84
      %s87 = sadd.s32 %s86, 1
      %p90 = scmp.eq.s32.totalorder %s26, 1
      %p91 = scmp.ne.s32.totalorder %s86, %s88
      %p92 = scmp.eq.s32.totalorder %s26, 0
      %p93 = por %p91, %p92
      %p94 = scmp.ne.s32.totalorder %s86, %s88
      %p95 = scmp.eq.s32.totalorder %s31, 1
      %p96 = por %p94, %p95
      %p97 = scmp.ne.s32.totalorder %s88, %s89
      %p98 = scmp.eq.s32.totalorder %s31, 0
      %p99 = por %p97, %p98
      %p100 = scmp.ne.s32.totalorder %s88, %s89
      %p101 = scmp.eq.s32.totalorder %s32, 1
      %p102 = por %p100, %p101
      %p104 = scmp.ne.s32.totalorder %s89, %s103
      %p105 = scmp.eq.s32.totalorder %s32, 0
      %p106 = por %p104, %p105
      %s108 = sadd.s32 %s107, 1
      %p111 = scmp.eq.s32.totalorder %s26, 1
      %p112 = scmp.ne.s32.totalorder %s107, %s109
      %p113 = scmp.eq.s32.totalorder %s26, 0
      %p114 = por %p112, %p113
      %p115 = scmp.ne.s32.totalorder %s107, %s109
      %p116 = scmp.eq.s32.totalorder %s31, 1
      %p117 = por %p115, %p116
      %p118 = scmp.ne.s32.totalorder %s109, %s110
      %p119 = scmp.eq.s32.totalorder %s31, 0
      %p120 = por %p118, %p119
      %p121 = scmp.ne.s32.totalorder %s109, %s110
      %p122 = scmp.eq.s32.totalorder %s32, 1
      %p123 = por %p121, %p122
      %p125 = scmp.ne.s32.totalorder %s110, %s124
      %p126 = scmp.eq.s32.totalorder %s32, 0
      %p127 = por %p125, %p126
      %s129 = sadd.s32 %s128, 1
      %p132 = scmp.eq.s32.totalorder %s26, 1
      %p133 = scmp.ne.s32.totalorder %s128, %s130
      %p134 = scmp.eq.s32.totalorder %s26, 0
      %p135 = por %p133, %p134
      %p136 = scmp.ne.s32.totalorder %s128, %s130
      %p137 = scmp.eq.s32.totalorder %s31, 1
      %p138 = por %p136, %p137
      %p139 = scmp.ne.s32.totalorder %s130, %s131
      %p140 = scmp.eq.s32.totalorder %s31, 0
      %p141 = por %p139, %p140
      %p142 = scmp.ne.s32.totalorder %s130, %s131
      %p143 = scmp.eq.s32.totalorder %s32, 1
      %p144 = por %p142, %p143
      %p146 = scmp.ne.s32.totalorder %s131, %s145
      %p147 = scmp.eq.s32.totalorder %s32, 0
      %p148 = por %p146, %p147
      %s149 = ssub.s32 %s26, %s33
      %p150 = scmp.eq.s32.totalorder %s149, 0
      %s152 = sadd.s32 %s151, 1
      %s153 = scalar_select %p150, %s151, %s152
      %p156 = pneg %p150
      %p157 = scmp.eq.s32.totalorder %s26, 1
      %p158 = por %p156, %p157
      %p159 = scmp.ne.s32.totalorder %s151, %s154
      %p160 = scmp.eq.s32.totalorder %s26, 0
      %p161 = por %p159, %p160
      %p162 = scmp.ne.s32.totalorder %s151, %s154
      %p163 = scmp.eq.s32.totalorder %s31, 1
      %p164 = por %p162, %p163
      %p165 = scmp.ne.s32.totalorder %s154, %s155
      %p166 = scmp.eq.s32.totalorder %s31, 0
      %p167 = por %p165, %p166
      %p168 = scmp.ne.s32.totalorder %s154, %s155
      %p169 = scmp.eq.s32.totalorder %s32, 1
      %p170 = por %p168, %p169
      %p172 = scmp.ne.s32.totalorder %s155, %s171
      %p173 = scmp.eq.s32.totalorder %s32, 0
      %p174 = por %p172, %p173
      %s175 = ssub.s32 %s26, %s33
      %p176 = scmp.eq.s32.totalorder %s175, 0
      %s178 = sadd.s32 %s177, 1
      %s179 = scalar_select %p176, %s177, %s178
      %p182 = pneg %p176
      %p183 = scmp.eq.s32.totalorder %s26, 1
      %p184 = por %p182, %p183
      %p185 = scmp.ne.s32.totalorder %s177, %s180
      %p186 = scmp.eq.s32.totalorder %s26, 0
      %p187 = por %p185, %p186
      %p188 = scmp.ne.s32.totalorder %s177, %s180
      %p189 = scmp.eq.s32.totalorder %s31, 1
      %p190 = por %p188, %p189
      %p191 = scmp.ne.s32.totalorder %s180, %s181
      %p192 = scmp.eq.s32.totalorder %s31, 0
      %p193 = por %p191, %p192
      %p194 = scmp.ne.s32.totalorder %s180, %s181
      %p195 = scmp.eq.s32.totalorder %s32, 1
      %p196 = por %p194, %p195
      %p198 = scmp.ne.s32.totalorder %s181, %s197
      %p199 = scmp.eq.s32.totalorder %s32, 0
      %p200 = por %p198, %p199
      %p201 = scmp.le.s32.totalorder 1, %s26
      %p202 = scmp.lt.s32.totalorder %s26, 3
      %p203 = pnand %p201, %p202
      %p204 = pneg %p203
      // Predicated region
      $region9: #{tpu_custom_call.1} parent=5 // pred_check
        _
      $region10: #{tpu_custom_call.1} parent=5 // pred_check_branch
        %206 = sbr.rel (%p203) target = $region12
      $region11: #{tpu_custom_call.1} parent=5 // pred_region
        %s207 = ssub.s32 %s26, 1
        // Predicated region
        $region13: #{tpu_custom_call.1} parent=11 // pred_check
          %p208 = pneg %p99
        $region14: #{tpu_custom_call.1} parent=11 // pred_check_branch
          %210 = sbr.rel (%p208) target = $region16
        $region15: #{tpu_custom_call.1} parent=11 // pred_region
          %s212 = ssub.s32 2048, 2048
          %213 = vsyncadd [#allocation6], %s212
          %s214 = sshll.u32 [#allocation7], 4
          %s215 = int_to_ptr.vmem [resolvable:$true] %s214
          %220 = dma.hbm_to_vmem [thread:$0]  %s2, 2048, %s215, [#allocation6], 128, 128, 8
        $region16: #{tpu_custom_call.1} parent=11 // pred_fallthru
          _
        // Predicated region
        $region17: #{tpu_custom_call.1} parent=11 // pred_check
          %p221 = pneg %p120
        $region18: #{tpu_custom_call.1} parent=11 // pred_check_branch
          %223 = sbr.rel (%p221) target = $region20
        $region19: #{tpu_custom_call.1} parent=11 // pred_region
          %s225 = ssub.s32 2048, 2048
          %226 = vsyncadd [#allocation9], %s225
          %s227 = sshll.u32 [#allocation8], 4
          %s228 = int_to_ptr.vmem [resolvable:$true] %s227
          %233 = dma.hbm_to_vmem [thread:$0]  %s3, 2048, %s228, [#allocation9], 128, 128, 8
        $region20: #{tpu_custom_call.1} parent=11 // pred_fallthru
          _
        // Predicated region
        $region21: #{tpu_custom_call.1} parent=11 // pred_check
          %p234 = pneg %p141
        $region22: #{tpu_custom_call.1} parent=11 // pred_check_branch
          %236 = sbr.rel (%p234) target = $region24
        $region23: #{tpu_custom_call.1} parent=11 // pred_region
          _
        $region24: #{tpu_custom_call.1} parent=11 // pred_fallthru
          _
      $region12: #{tpu_custom_call.1} parent=5 // pred_fallthru
        _
      %p237 = scmp.lt.s32.totalorder %s26, 2
      // Predicated region
      $region25: #{tpu_custom_call.1} parent=5 // pred_check
        %p238 = pneg %p237
      $region26: #{tpu_custom_call.1} parent=5 // pred_check_branch
        %240 = sbr.rel (%p238) target = $region28
      $region27: #{tpu_custom_call.1} parent=5 // pred_region
        // Predicated region
        $region29: #{tpu_custom_call.1} parent=27 // pred_check
          %p241 = pneg %p46
        $region30: #{tpu_custom_call.1} parent=27 // pred_check_branch
          %243 = sbr.rel (%p241) target = $region32
        $region31: #{tpu_custom_call.1} parent=27 // pred_region
          %s244 = sand.u32 %s36, 1
          %s245 = scalar_lea.sflag [#allocation3], %s244
          %s246 = sand.u32 %s36, 1
          %s247 = smul.addr %s246, 128
          %s248 = scalar_lea.vmem [#allocation2], %s247
          %s249 = smul.u32 16, %s26
          %s251 = ssub.s32 2048, 2048
          %252 = vsyncadd %s245, %s251
          %s253 = smul.addr %s249, 128
          %s254 = scalar_lea.hbm %s0, %s253
          %s255 = sshll.u32 %s248, 4
          %s256 = int_to_ptr.vmem [resolvable:$true] %s255
          %261 = dma.hbm_to_vmem [thread:$0]  %s254, 2048, %s256, %s245, 128, 128, 8
        $region32: #{tpu_custom_call.1} parent=27 // pred_fallthru
          _
        // Predicated region
        $region33: #{tpu_custom_call.1} parent=27 // pred_check
          %p262 = pneg %p72
        $region34: #{tpu_custom_call.1} parent=27 // pred_check_branch
          %264 = sbr.rel (%p262) target = $region36
        $region35: #{tpu_custom_call.1} parent=27 // pred_region
          %s265 = sand.u32 %s26, 1
          %s266 = scalar_lea.sflag [#allocation6], %s265
          %s267 = sand.u32 %s62, 1
          %s268 = smul.addr %s267, 128
          %s269 = scalar_lea.vmem [#allocation5], %s268
          %s270 = smul.u32 16, %s26
          %s272 = ssub.s32 2048, 2048
          %273 = vsyncadd %s266, %s272
          %s274 = smul.addr %s270, 128
          %s275 = scalar_lea.hbm %s1, %s274
          %s276 = sshll.u32 %s269, 4
          %s277 = int_to_ptr.vmem [resolvable:$true] %s276
          %282 = dma.hbm_to_vmem [thread:$0]  %s275, 2048, %s277, %s266, 128, 128, 8
        $region36: #{tpu_custom_call.1} parent=27 // pred_fallthru
          _
      $region28: #{tpu_custom_call.1} parent=5 // pred_fallthru
        _
      %p283 = scmp.le.s32.totalorder 1, %s26
      %p284 = scmp.lt.s32.totalorder %s26, 3
      %p285 = pnand %p283, %p284
      %p286 = pneg %p285
      // Predicated region
      $region37: #{tpu_custom_call.1} parent=5 // pred_check
        _
      $region38: #{tpu_custom_call.1} parent=5 // pred_check_branch
        %288 = sbr.rel (%p285) target = $region40
      $region39: #{tpu_custom_call.1} parent=5 // pred_region
        %s289 = ssub.s32 %s26, 1
        %s290 = sand.u32 %s39, 1
        %s291 = scalar_lea.sflag [#allocation3], %s290
        %s292 = sand.u32 %s39, 1
        %s293 = smul.addr %s292, 128
        %s294 = scalar_lea.vmem [#allocation2], %s293
        // Predicated region
        $region41: #{tpu_custom_call.1} parent=39 // pred_check
          %p295 = pneg %p52
        $region42: #{tpu_custom_call.1} parent=39 // pred_check_branch
          %297 = sbr.rel (%p295) target = $region44
        $region43: #{tpu_custom_call.1} parent=39 // pred_region
          %298 = dma.done %s291, 2048
        $region44: #{tpu_custom_call.1} parent=39 // pred_fallthru
          _
        %s299 = sand.u32 %s31, 1
        %s300 = scalar_lea.sflag [#allocation6], %s299
        %s301 = sand.u32 %s65, 1
        %s302 = smul.addr %s301, 128
        %s303 = scalar_lea.vmem [#allocation5], %s302
        // Predicated region
        $region45: #{tpu_custom_call.1} parent=39 // pred_check
          %p304 = pneg %p78
        $region46: #{tpu_custom_call.1} parent=39 // pred_check_branch
          %306 = sbr.rel (%p304) target = $region48
        $region47: #{tpu_custom_call.1} parent=39 // pred_region
          %307 = dma.done %s300, 2048
        $region48: #{tpu_custom_call.1} parent=39 // pred_fallthru
          _
        // Predicated region
        $region49: #{tpu_custom_call.1} parent=39 // pred_check
          %p308 = pneg %p99
        $region50: #{tpu_custom_call.1} parent=39 // pred_check_branch
          %310 = sbr.rel (%p308) target = $region52
        $region51: #{tpu_custom_call.1} parent=39 // pred_region
          %311 = dma.done [#allocation6], 2048
        $region52: #{tpu_custom_call.1} parent=39 // pred_fallthru
          _
        // Predicated region
        $region53: #{tpu_custom_call.1} parent=39 // pred_check
          %p312 = pneg %p120
        $region54: #{tpu_custom_call.1} parent=39 // pred_check_branch
          %314 = sbr.rel (%p312) target = $region56
        $region55: #{tpu_custom_call.1} parent=39 // pred_region
          %315 = dma.done [#allocation9], 2048
        $region56: #{tpu_custom_call.1} parent=39 // pred_fallthru
          _
        %s316 = sand.u32 %s39, 1
        %s317 = scalar_lea.sflag [#allocation3], %s316
        %s318 = sand.u32 %s39, 1
        %s319 = smul.addr %s318, 128
        %s320 = scalar_lea.vmem [#allocation2], %s319
        %p321 = pneg %p52
        %p322 = pneg %p49
        %s323 = sand.u32 %s31, 1
        %s324 = scalar_lea.sflag [#allocation6], %s323
        %s325 = sand.u32 %s65, 1
        %s326 = smul.addr %s325, 128
        %s327 = scalar_lea.vmem [#allocation5], %s326
        %p328 = pneg %p78
        %p329 = pneg %p75
        %p330 = pneg %p99
        %p331 = pneg %p96
        %p332 = pneg %p120
        %p333 = pneg %p117
        %p334 = pneg %p141
        %p335 = pneg %p138
        %p336 = pneg %p167
        %p337 = pneg %p164
        %s338 = sand.u32 %s154, 1
        %s339 = scalar_lea.sflag [#allocation4], %s338
        %s340 = sand.u32 %s154, 1
        %s341 = smul.addr %s340, 128
        %s342 = scalar_lea.vmem [#allocation10], %s341
        %p343 = pneg %p193
        %p344 = pneg %p190
        %s345 = sand.u32 %s180, 1
        %s346 = scalar_lea.sflag [#allocation12], %s345
        %s347 = sand.u32 %s180, 1
        %s348 = smul.addr %s347, 8
        %s349 = scalar_lea.vmem [#allocation11], %s348
        %s350 = smul.u32 16, %s31
        %s351 = smul.u32 16, %s31
        %s352 = smul.u32 16, %s31
        %v353 = vld [vmem:[%s294] sm:$0xff]
        %v354 = vld [vmem:[%s294 + $0x8] sm:$0xff]
        %v355 = vld [vmem:[%s294 + $0x10] sm:$0xff]
        %v356 = vld [vmem:[%s294 + $0x18] sm:$0xff]
        %v357 = vld [vmem:[%s294 + $0x20] sm:$0xff]
        %v358 = vld [vmem:[%s294 + $0x28] sm:$0xff]
        %v359 = vld [vmem:[%s294 + $0x30] sm:$0xff]
        %v360 = vld [vmem:[%s294 + $0x38] sm:$0xff]
        %v361 = vld [vmem:[%s294 + $0x40] sm:$0xff]
        %v362 = vld [vmem:[%s294 + $0x48] sm:$0xff]
        %v363 = vld [vmem:[%s294 + $0x50] sm:$0xff]
        %v364 = vld [vmem:[%s294 + $0x58] sm:$0xff]
        %v365 = vld [vmem:[%s294 + $0x60] sm:$0xff]
        %v366 = vld [vmem:[%s294 + $0x68] sm:$0xff]
        %v367 = vld [vmem:[%s294 + $0x70] sm:$0xff]
        %v368 = vld [vmem:[%s294 + $0x78] sm:$0xff]
        %v369 = vld [vmem:[#allocation7] sm:$0xff]
        %v370 = vld [vmem:[#allocation7 + $0x8] sm:$0xff]
        %v371 = vld [vmem:[#allocation7 + $0x10] sm:$0xff]
        %v372 = vld [vmem:[#allocation7 + $0x18] sm:$0xff]
        %v373 = vld [vmem:[#allocation7 + $0x20] sm:$0xff]
        %v374 = vld [vmem:[#allocation7 + $0x28] sm:$0xff]
        %v375 = vld [vmem:[#allocation7 + $0x30] sm:$0xff]
        %v376 = vld [vmem:[#allocation7 + $0x38] sm:$0xff]
        %v377 = vld [vmem:[#allocation7 + $0x40] sm:$0xff]
        %v378 = vld [vmem:[#allocation7 + $0x48] sm:$0xff]
        %v379 = vld [vmem:[#allocation7 + $0x50] sm:$0xff]
        %v380 = vld [vmem:[#allocation7 + $0x58] sm:$0xff]
        %v381 = vld [vmem:[#allocation7 + $0x60] sm:$0xff]
        %v382 = vld [vmem:[#allocation7 + $0x68] sm:$0xff]
        %v383 = vld [vmem:[#allocation7 + $0x70] sm:$0xff]
        %v384 = vld [vmem:[#allocation7 + $0x78] sm:$0xff]
        %v385 = vld [vmem:[#allocation8] sm:$0xff]
        %v386 = vld [vmem:[#allocation8 + $0x8] sm:$0xff]
        %v387 = vld [vmem:[#allocation8 + $0x10] sm:$0xff]
        %v388 = vld [vmem:[#allocation8 + $0x18] sm:$0xff]
        %v389 = vld [vmem:[#allocation8 + $0x20] sm:$0xff]
        %v390 = vld [vmem:[#allocation8 + $0x28] sm:$0xff]
        %v391 = vld [vmem:[#allocation8 + $0x30] sm:$0xff]
        %v392 = vld [vmem:[#allocation8 + $0x38] sm:$0xff]
        %v393 = vld [vmem:[#allocation8 + $0x40] sm:$0xff]
        %v394 = vld [vmem:[#allocation8 + $0x48] sm:$0xff]
        %v395 = vld [vmem:[#allocation8 + $0x50] sm:$0xff]
        %v396 = vld [vmem:[#allocation8 + $0x58] sm:$0xff]
        %v397 = vld [vmem:[#allocation8 + $0x60] sm:$0xff]
        %v398 = vld [vmem:[#allocation8 + $0x68] sm:$0xff]
        %v399 = vld [vmem:[#allocation8 + $0x70] sm:$0xff]
        %v400 = vld [vmem:[#allocation8 + $0x78] sm:$0xff]
        %v401 = vld [vmem:[%s4] sm:$0x1]
        %v403 = vlaneseq
        %v404 = vshrl.u32 %v403, 7
        %v405 = vsub.s32 0, %v404
        %v406 = vrot.slane %v401, %v405
        %408 = vmatprep.subr.mxu0 0.0
        %409 = vmatpush1.msra.mxu0 %v369
        %410 = vmatprep.subr.mxu0 0.0
        %411 = vmatpush1.msra.mxu0 %v370
        %412 = vmatprep.subr.mxu0 0.0
        %413 = vmatpush1.msra.mxu0 %v371
        %414 = vmatprep.subr.mxu0 0.0
        %415 = vmatpush1.msra.mxu0 %v372
        %416 = vmatprep.subr.mxu0 0.0
        %417 = vmatpush1.msra.mxu0 %v373
        %418 = vmatprep.subr.mxu0 0.0
        %419 = vmatpush1.msra.mxu0 %v374
        %420 = vmatprep.subr.mxu0 0.0
        %421 = vmatpush1.msra.mxu0 %v375
        %422 = vmatprep.subr.mxu0 0.0
        %423 = vmatpush1.msra.mxu0 %v376
        %424 = vmatprep.subr.mxu0 0.0
        %425 = vmatpush1.msra.mxu0 %v377
        %426 = vmatprep.subr.mxu0 0.0
        %427 = vmatpush1.msra.mxu0 %v378
        %428 = vmatprep.subr.mxu0 0.0
        %429 = vmatpush1.msra.mxu0 %v379
        %430 = vmatprep.subr.mxu0 0.0
        %431 = vmatpush1.msra.mxu0 %v380
        %432 = vmatprep.subr.mxu0 0.0
        %433 = vmatpush1.msra.mxu0 %v381
        %434 = vmatprep.subr.mxu0 0.0
        %435 = vmatpush1.msra.mxu0 %v382
        %436 = vmatprep.subr.mxu0 0.0
        %437 = vmatpush1.msra.mxu0 %v383
        %438 = vmatprep.subr.mxu0 0.0
        %439 = vmatpush1.msra.mxu0 %v384
        %440 = vmatprep.subr.mxu0 0.0
        %441 = vmatpush1.msra.mxu0 0.0
        %442 = vmatprep.subr.mxu0 0.0
        %443 = vmatpush1.msra.mxu0 0.0
        %444 = vmatprep.subr.mxu0 0.0
        %445 = vmatpush1.msra.mxu0 0.0
        %446 = vmatprep.subr.mxu0 0.0
        %447 = vmatpush1.msra.mxu0 0.0
        %448 = vmatprep.subr.mxu0 0.0
        %449 = vmatpush1.msra.mxu0 0.0
        %450 = vmatprep.subr.mxu0 0.0
        %451 = vmatpush1.msra.mxu0 0.0
        %452 = vmatprep.subr.mxu0 0.0
        %453 = vmatpush1.msra.mxu0 0.0
        %454 = vmatprep.subr.mxu0 0.0
        %455 = vmatpush1.msra.mxu0 0.0
        %456 = vmatprep.subr.mxu0 0.0
        %457 = vmatpush1.msra.mxu0 0.0
        %458 = vmatprep.subr.mxu0 0.0
        %459 = vmatpush1.msra.mxu0 0.0
        %460 = vmatprep.subr.mxu0 0.0
        %461 = vmatpush1.msra.mxu0 0.0
        %462 = vmatprep.subr.mxu0 0.0
        %463 = vmatpush1.msra.mxu0 0.0
        %464 = vmatprep.subr.mxu0 0.0
        %465 = vmatpush1.msra.mxu0 0.0
        %466 = vmatprep.subr.mxu0 0.0
        %467 = vmatpush1.msra.mxu0 0.0
        %468 = vmatprep.subr.mxu0 0.0
        %469 = vmatpush1.msra.mxu0 0.0
        %470 = vmatprep.subr.mxu0 0.0
        %471 = vmatpush1.msra.mxu0 0.0
        %472 = vmatprep.mubr.f32.mxu0 0.0
        %473 = vmatmul.mubr.f32.gmra.mrb[0].mxu0 %v353
        %v474 = vpop.f32.mrb[0].mxu0
        %v475 = vadd.f32 %v406, %v474
        %v476 = vpop.f32.mrb[0].mxu0
        %477 = vmatprep.mubr.f32.mxu0 0.0
        %478 = vmatmul.mubr.f32.gmra.mrb[0].mxu0 %v354
        %v479 = vpop.f32.mrb[0].mxu0
        %v480 = vadd.f32 %v406, %v479
        %v481 = vpop.f32.mrb[0].mxu0
        %482 = vmatprep.mubr.f32.mxu0 0.0
        %483 = vmatmul.mubr.f32.gmra.mrb[0].mxu0 %v355
        %v484 = vpop.f32.mrb[0].mxu0
        %v485 = vadd.f32 %v406, %v484
        %v486 = vpop.f32.mrb[0].mxu0
        %487 = vmatprep.mubr.f32.mxu0 0.0
        %488 = vmatmul.mubr.f32.gmra.mrb[0].mxu0 %v356
        %v489 = vpop.f32.mrb[0].mxu0
        %v490 = vadd.f32 %v406, %v489
        %v491 = vpop.f32.mrb[0].mxu0
        %492 = vmatprep.mubr.f32.mxu0 0.0
        %493 = vmatmul.mubr.f32.gmra.mrb[0].mxu0 %v357
        %v494 = vpop.f32.mrb[0].mxu0
        %v495 = vadd.f32 %v406, %v494
        %v496 = vpop.f32.mrb[0].mxu0
        %497 = vmatprep.mubr.f32.mxu0 0.0
        %498 = vmatmul.mubr.f32.gmra.mrb[0].mxu0 %v358
        %v499 = vpop.f32.mrb[0].mxu0
        %v500 = vadd.f32 %v406, %v499
        %v501 = vpop.f32.mrb[0].mxu0
        %502 = vmatprep.mubr.f32.mxu0 0.0
        %503 = vmatmul.mubr.f32.gmra.mrb[0].mxu0 %v359
        %v504 = vpop.f32.mrb[0].mxu0
        %v505 = vadd.f32 %v406, %v504
        %v506 = vpop.f32.mrb[0].mxu0
        %507 = vmatprep.mubr.f32.mxu0 0.0
        %508 = vmatmul.mubr.f32.gmra.mrb[0].mxu0 %v360
        %v509 = vpop.f32.mrb[0].mxu0
        %v510 = vadd.f32 %v406, %v509
        %v511 = vpop.f32.mrb[0].mxu0
        %512 = vmatprep.mubr.f32.mxu0 0.0
        %513 = vmatmul.mubr.f32.gmra.mrb[0].mxu0 %v361
        %v514 = vpop.f32.mrb[0].mxu0
        %v515 = vadd.f32 %v406, %v514
        %v516 = vpop.f32.mrb[0].mxu0
        %517 = vmatprep.mubr.f32.mxu0 0.0
        %518 = vmatmul.mubr.f32.gmra.mrb[0].mxu0 %v362
        %v519 = vpop.f32.mrb[0].mxu0
        %v520 = vadd.f32 %v406, %v519
        %v521 = vpop.f32.mrb[0].mxu0
        %522 = vmatprep.mubr.f32.mxu0 0.0
        %523 = vmatmul.mubr.f32.gmra.mrb[0].mxu0 %v363
        %v524 = vpop.f32.mrb[0].mxu0
        %v525 = vadd.f32 %v406, %v524
        %v526 = vpop.f32.mrb[0].mxu0
        %527 = vmatprep.mubr.f32.mxu0 0.0
        %528 = vmatmul.mubr.f32.gmra.mrb[0].mxu0 %v364
        %v529 = vpop.f32.mrb[0].mxu0
        %v530 = vadd.f32 %v406, %v529
        %v531 = vpop.f32.mrb[0].mxu0
        %532 = vmatprep.mubr.f32.mxu0 0.0
        %533 = vmatmul.mubr.f32.gmra.mrb[0].mxu0 %v365
        %v534 = vpop.f32.mrb[0].mxu0
        %v535 = vadd.f32 %v406, %v534
        %v536 = vpop.f32.mrb[0].mxu0
        %537 = vmatprep.mubr.f32.mxu0 0.0
        %538 = vmatmul.mubr.f32.gmra.mrb[0].mxu0 %v366
        %v539 = vpop.f32.mrb[0].mxu0
        %v540 = vadd.f32 %v406, %v539
        %v541 = vpop.f32.mrb[0].mxu0
        %542 = vmatprep.mubr.f32.mxu0 0.0
        %543 = vmatmul.mubr.f32.gmra.mrb[0].mxu0 %v367
        %v544 = vpop.f32.mrb[0].mxu0
        %v545 = vadd.f32 %v406, %v544
        %v546 = vpop.f32.mrb[0].mxu0
        %547 = vmatprep.mubr.f32.mxu0 0.0
        %548 = vmatmul.mubr.f32.gmra.mrb[0].mxu0 %v368
        %v549 = vpop.f32.mrb[0].mxu0
        %v550 = vadd.f32 %v406, %v549
        %v551 = vpop.f32.mrb[0].mxu0
        %552 = vdwg.mxu0
        %v553 = vxor.u32 %v475, 2147483648
        %v554 = vxor.u32 %v480, 2147483648
        %v555 = vxor.u32 %v485, 2147483648
        %v556 = vxor.u32 %v490, 2147483648
        %v557 = vxor.u32 %v495, 2147483648
        %v558 = vxor.u32 %v500, 2147483648
        %v559 = vxor.u32 %v505, 2147483648
        %v560 = vxor.u32 %v510, 2147483648
        %v561 = vxor.u32 %v515, 2147483648
        %v562 = vxor.u32 %v520, 2147483648
        %v563 = vxor.u32 %v525, 2147483648
        %v564 = vxor.u32 %v530, 2147483648
        %v565 = vxor.u32 %v535, 2147483648
        %v566 = vxor.u32 %v540, 2147483648
        %v567 = vxor.u32 %v545, 2147483648
        %v568 = vxor.u32 %v550, 2147483648
        %v569 = vmul.f32 %v553, 1.442695
        %v570 = vpow.pop %v569
        %v571 = vmul.f32 %v554, 1.442695
        %v572 = vpow.pop %v571
        %v573 = vmul.f32 %v555, 1.442695
        %v574 = vpow.pop %v573
        %v575 = vmul.f32 %v556, 1.442695
        %v576 = vpow.pop %v575
        %v577 = vmul.f32 %v557, 1.442695
        %v578 = vpow.pop %v577
        %v579 = vmul.f32 %v558, 1.442695
        %v580 = vpow.pop %v579
        %v581 = vmul.f32 %v559, 1.442695
        %v582 = vpow.pop %v581
        %v583 = vmul.f32 %v560, 1.442695
        %v584 = vpow.pop %v583
        %v585 = vmul.f32 %v561, 1.442695
        %v586 = vpow.pop %v585
        %v587 = vmul.f32 %v562, 1.442695
        %v588 = vpow.pop %v587
        %v589 = vmul.f32 %v563, 1.442695
        %v590 = vpow.pop %v589
        %v591 = vmul.f32 %v564, 1.442695
        %v592 = vpow.pop %v591
        %v593 = vmul.f32 %v565, 1.442695
        %v594 = vpow.pop %v593
        %v595 = vmul.f32 %v566, 1.442695
        %v596 = vpow.pop %v595
        %v597 = vmul.f32 %v567, 1.442695
        %v598 = vpow.pop %v597
        %v599 = vmul.f32 %v568, 1.442695
        %v600 = vpow.pop %v599
        %v601 = vadd.f32 %v570, 1.0
        %v602 = vadd.f32 %v572, 1.0
        %v603 = vadd.f32 %v574, 1.0
        %v604 = vadd.f32 %v576, 1.0
        %v605 = vadd.f32 %v578, 1.0
        %v606 = vadd.f32 %v580, 1.0
        %v607 = vadd.f32 %v582, 1.0
        %v608 = vadd.f32 %v584, 1.0
        %v609 = vadd.f32 %v586, 1.0
        %v610 = vadd.f32 %v588, 1.0
        %v611 = vadd.f32 %v590, 1.0
        %v612 = vadd.f32 %v592, 1.0
        %v613 = vadd.f32 %v594, 1.0
        %v614 = vadd.f32 %v596, 1.0
        %v615 = vadd.f32 %v598, 1.0
        %v616 = vadd.f32 %v600, 1.0
        %v617 = vrcp.pop %v601
        %v618 = vmul.f32 1.0, %v617
        %v619 = vrcp.pop %v602
        %v620 = vmul.f32 1.0, %v619
        %v621 = vrcp.pop %v603
        %v622 = vmul.f32 1.0, %v621
        %v623 = vrcp.pop %v604
        %v624 = vmul.f32 1.0, %v623
        %v625 = vrcp.pop %v605
        %v626 = vmul.f32 1.0, %v625
        %v627 = vrcp.pop %v606
        %v628 = vmul.f32 1.0, %v627
        %v629 = vrcp.pop %v607
        %v630 = vmul.f32 1.0, %v629
        %v631 = vrcp.pop %v608
        %v632 = vmul.f32 1.0, %v631
        %v633 = vrcp.pop %v609
        %v634 = vmul.f32 1.0, %v633
        %v635 = vrcp.pop %v610
        %v636 = vmul.f32 1.0, %v635
        %v637 = vrcp.pop %v611
        %v638 = vmul.f32 1.0, %v637
        %v639 = vrcp.pop %v612
        %v640 = vmul.f32 1.0, %v639
        %v641 = vrcp.pop %v613
        %v642 = vmul.f32 1.0, %v641
        %v643 = vrcp.pop %v614
        %v644 = vmul.f32 1.0, %v643
        %v645 = vrcp.pop %v615
        %v646 = vmul.f32 1.0, %v645
        %v647 = vrcp.pop %v616
        %v648 = vmul.f32 1.0, %v647
        %v649 = vld [vmem:[%s303] sm:$0xff]
        %v650 = vld [vmem:[%s303 + $0x8] sm:$0xff]
        %v651 = vld [vmem:[%s303 + $0x10] sm:$0xff]
        %v652 = vld [vmem:[%s303 + $0x18] sm:$0xff]
        %v653 = vld [vmem:[%s303 + $0x20] sm:$0xff]
        %v654 = vld [vmem:[%s303 + $0x28] sm:$0xff]
        %v655 = vld [vmem:[%s303 + $0x30] sm:$0xff]
        %v656 = vld [vmem:[%s303 + $0x38] sm:$0xff]
        %v657 = vld [vmem:[%s303 + $0x40] sm:$0xff]
        %v658 = vld [vmem:[%s303 + $0x48] sm:$0xff]
        %v659 = vld [vmem:[%s303 + $0x50] sm:$0xff]
        %v660 = vld [vmem:[%s303 + $0x58] sm:$0xff]
        %v661 = vld [vmem:[%s303 + $0x60] sm:$0xff]
        %v662 = vld [vmem:[%s303 + $0x68] sm:$0xff]
        %v663 = vld [vmem:[%s303 + $0x70] sm:$0xff]
        %v664 = vld [vmem:[%s303 + $0x78] sm:$0xff]
        %v665 = vmul.f32 %v649, %v649
        %v666 = vmul.f32 %v650, %v650
        %v667 = vmul.f32 %v651, %v651
        %v668 = vmul.f32 %v652, %v652
        %v669 = vmul.f32 %v653, %v653
        %v670 = vmul.f32 %v654, %v654
        %v671 = vmul.f32 %v655, %v655
        %v672 = vmul.f32 %v656, %v656
        %v673 = vmul.f32 %v657, %v657
        %v674 = vmul.f32 %v658, %v658
        %v675 = vmul.f32 %v659, %v659
        %v676 = vmul.f32 %v660, %v660
        %v677 = vmul.f32 %v661, %v661
        %v678 = vmul.f32 %v662, %v662
        %v679 = vmul.f32 %v663, %v663
        %v680 = vmul.f32 %v664, %v664
        %681 = vadd.xlane.f32.xlu0 %v665
        %v682 = vpop.xlane.xlu0 %681
        %683 = vadd.xlane.f32.xlu0 %v666
        %v684 = vpop.xlane.xlu0 %683
        %685 = vadd.xlane.f32.xlu0 %v667
        %v686 = vpop.xlane.xlu0 %685
        %687 = vadd.xlane.f32.xlu0 %v668
        %v688 = vpop.xlane.xlu0 %687
        %689 = vadd.xlane.f32.xlu0 %v669
        %v690 = vpop.xlane.xlu0 %689
        %691 = vadd.xlane.f32.xlu0 %v670
        %v692 = vpop.xlane.xlu0 %691
        %693 = vadd.xlane.f32.xlu0 %v671
        %v694 = vpop.xlane.xlu0 %693
        %695 = vadd.xlane.f32.xlu0 %v672
        %v696 = vpop.xlane.xlu0 %695
        %697 = vadd.xlane.f32.xlu0 %v673
        %v698 = vpop.xlane.xlu0 %697
        %699 = vadd.xlane.f32.xlu0 %v674
        %v700 = vpop.xlane.xlu0 %699
        %701 = vadd.xlane.f32.xlu0 %v675
        %v702 = vpop.xlane.xlu0 %701
        %703 = vadd.xlane.f32.xlu0 %v676
        %v704 = vpop.xlane.xlu0 %703
        %705 = vadd.xlane.f32.xlu0 %v677
        %v706 = vpop.xlane.xlu0 %705
        %707 = vadd.xlane.f32.xlu0 %v678
        %v708 = vpop.xlane.xlu0 %707
        %709 = vadd.xlane.f32.xlu0 %v679
        %v710 = vpop.xlane.xlu0 %709
        %711 = vadd.xlane.f32.xlu0 %v680
        %v712 = vpop.xlane.xlu0 %711
        %v713 = vrsqrt.pop %v682
        %v714 = vrsqrt.pop %v684
        %v715 = vrsqrt.pop %v686
        %v716 = vrsqrt.pop %v688
        %v717 = vrsqrt.pop %v690
        %v718 = vrsqrt.pop %v692
        %v719 = vrsqrt.pop %v694
        %v720 = vrsqrt.pop %v696
        %v721 = vrsqrt.pop %v698
        %v722 = vrsqrt.pop %v700
        %v723 = vrsqrt.pop %v702
        %v724 = vrsqrt.pop %v704
        %v725 = vrsqrt.pop %v706
        %v726 = vrsqrt.pop %v708
        %v727 = vrsqrt.pop %v710
        %v728 = vrsqrt.pop %v712
        %v729 = vmul.f32 %v649, %v713
        %v730 = vmul.f32 %v650, %v714
        %v731 = vmul.f32 %v651, %v715
        %v732 = vmul.f32 %v652, %v716
        %v733 = vmul.f32 %v653, %v717
        %v734 = vmul.f32 %v654, %v718
        %v735 = vmul.f32 %v655, %v719
        %v736 = vmul.f32 %v656, %v720
        %v737 = vmul.f32 %v657, %v721
        %v738 = vmul.f32 %v658, %v722
        %v739 = vmul.f32 %v659, %v723
        %v740 = vmul.f32 %v660, %v724
        %v741 = vmul.f32 %v661, %v725
        %v742 = vmul.f32 %v662, %v726
        %v743 = vmul.f32 %v663, %v727
        %v744 = vmul.f32 %v664, %v728
        %745 = vmatprep.subr.mxu0 0.0
        %746 = vmatpush1.msra.mxu0 %v369
        %747 = vmatprep.subr.mxu0 0.0
        %748 = vmatpush1.msra.mxu0 %v370
        %749 = vmatprep.subr.mxu0 0.0
        %750 = vmatpush1.msra.mxu0 %v371
        %751 = vmatprep.subr.mxu0 0.0
        %752 = vmatpush1.msra.mxu0 %v372
        %753 = vmatprep.subr.mxu0 0.0
        %754 = vmatpush1.msra.mxu0 %v373
        %755 = vmatprep.subr.mxu0 0.0
        %756 = vmatpush1.msra.mxu0 %v374
        %757 = vmatprep.subr.mxu0 0.0
        %758 = vmatpush1.msra.mxu0 %v375
        %759 = vmatprep.subr.mxu0 0.0
        %760 = vmatpush1.msra.mxu0 %v376
        %761 = vmatprep.subr.mxu0 0.0
        %762 = vmatpush1.msra.mxu0 %v377
        %763 = vmatprep.subr.mxu0 0.0
        %764 = vmatpush1.msra.mxu0 %v378
        %765 = vmatprep.subr.mxu0 0.0
        %766 = vmatpush1.msra.mxu0 %v379
        %767 = vmatprep.subr.mxu0 0.0
        %768 = vmatpush1.msra.mxu0 %v380
        %769 = vmatprep.subr.mxu0 0.0
        %770 = vmatpush1.msra.mxu0 %v381
        %771 = vmatprep.subr.mxu0 0.0
        %772 = vmatpush1.msra.mxu0 %v382
        %773 = vmatprep.subr.mxu0 0.0
        %774 = vmatpush1.msra.mxu0 %v383
        %775 = vmatprep.subr.mxu0 0.0
        %776 = vmatpush1.msra.mxu0 %v384
        %777 = vmatprep.subr.mxu0 0.0
        %778 = vmatpush1.msra.mxu0 0.0
        %779 = vmatprep.subr.mxu0 0.0
        %780 = vmatpush1.msra.mxu0 0.0
        %781 = vmatprep.subr.mxu0 0.0
        %782 = vmatpush1.msra.mxu0 0.0
        %783 = vmatprep.subr.mxu0 0.0
        %784 = vmatpush1.msra.mxu0 0.0
        %785 = vmatprep.subr.mxu0 0.0
        %786 = vmatpush1.msra.mxu0 0.0
        %787 = vmatprep.subr.mxu0 0.0
        %788 = vmatpush1.msra.mxu0 0.0
        %789 = vmatprep.subr.mxu0 0.0
        %790 = vmatpush1.msra.mxu0 0.0
        %791 = vmatprep.subr.mxu0 0.0
        %792 = vmatpush1.msra.mxu0 0.0
        %793 = vmatprep.subr.mxu0 0.0
        %794 = vmatpush1.msra.mxu0 0.0
        %795 = vmatprep.subr.mxu0 0.0
        %796 = vmatpush1.msra.mxu0 0.0
        %797 = vmatprep.subr.mxu0 0.0
        %798 = vmatpush1.msra.mxu0 0.0
        %799 = vmatprep.subr.mxu0 0.0
        %800 = vmatpush1.msra.mxu0 0.0
        %801 = vmatprep.subr.mxu0 0.0
        %802 = vmatpush1.msra.mxu0 0.0
        %803 = vmatprep.subr.mxu0 0.0
        %804 = vmatpush1.msra.mxu0 0.0
        %805 = vmatprep.subr.mxu0 0.0
        %806 = vmatpush1.msra.mxu0 0.0
        %807 = vmatprep.subr.mxu0 0.0
        %808 = vmatpush1.msra.mxu0 0.0
        %809 = vmatprep.mubr.f32.mxu0 0.0
        %810 = vmatmul.mubr.f32.gmra.mrb[0].mxu0 %v729
        %v811 = vpop.f32.mrb[0].mxu0
        %v812 = vadd.f32 0.0, %v811
        %v813 = vpop.f32.mrb[0].mxu0
        %814 = vmatprep.mubr.f32.mxu0 0.0
        %815 = vmatmul.mubr.f32.gmra.mrb[0].mxu0 %v730
        %v816 = vpop.f32.mrb[0].mxu0
        %v817 = vadd.f32 0.0, %v816
        %v818 = vpop.f32.mrb[0].mxu0
        %819 = vmatprep.mubr.f32.mxu0 0.0
        %820 = vmatmul.mubr.f32.gmra.mrb[0].mxu0 %v731
        %v821 = vpop.f32.mrb[0].mxu0
        %v822 = vadd.f32 0.0, %v821
        %v823 = vpop.f32.mrb[0].mxu0
        %824 = vmatprep.mubr.f32.mxu0 0.0
        %825 = vmatmul.mubr.f32.gmra.mrb[0].mxu0 %v732
        %v826 = vpop.f32.mrb[0].mxu0
        %v827 = vadd.f32 0.0, %v826
        %v828 = vpop.f32.mrb[0].mxu0
        %829 = vmatprep.mubr.f32.mxu0 0.0
        %830 = vmatmul.mubr.f32.gmra.mrb[0].mxu0 %v733
        %v831 = vpop.f32.mrb[0].mxu0
        %v832 = vadd.f32 0.0, %v831
        %v833 = vpop.f32.mrb[0].mxu0
        %834 = vmatprep.mubr.f32.mxu0 0.0
        %835 = vmatmul.mubr.f32.gmra.mrb[0].mxu0 %v734
        %v836 = vpop.f32.mrb[0].mxu0
        %v837 = vadd.f32 0.0, %v836
        %v838 = vpop.f32.mrb[0].mxu0
        %839 = vmatprep.mubr.f32.mxu0 0.0
        %840 = vmatmul.mubr.f32.gmra.mrb[0].mxu0 %v735
        %v841 = vpop.f32.mrb[0].mxu0
        %v842 = vadd.f32 0.0, %v841
        %v843 = vpop.f32.mrb[0].mxu0
        %844 = vmatprep.mubr.f32.mxu0 0.0
        %845 = vmatmul.mubr.f32.gmra.mrb[0].mxu0 %v736
        %v846 = vpop.f32.mrb[0].mxu0
        %v847 = vadd.f32 0.0, %v846
        %v848 = vpop.f32.mrb[0].mxu0
        %849 = vmatprep.mubr.f32.mxu0 0.0
        %850 = vmatmul.mubr.f32.gmra.mrb[0].mxu0 %v737
        %v851 = vpop.f32.mrb[0].mxu0
        %v852 = vadd.f32 0.0, %v851
        %v853 = vpop.f32.mrb[0].mxu0
        %854 = vmatprep.mubr.f32.mxu0 0.0
        %855 = vmatmul.mubr.f32.gmra.mrb[0].mxu0 %v738
        %v856 = vpop.f32.mrb[0].mxu0
        %v857 = vadd.f32 0.0, %v856
        %v858 = vpop.f32.mrb[0].mxu0
        %859 = vmatprep.mubr.f32.mxu0 0.0
        %860 = vmatmul.mubr.f32.gmra.mrb[0].mxu0 %v739
        %v861 = vpop.f32.mrb[0].mxu0
        %v862 = vadd.f32 0.0, %v861
        %v863 = vpop.f32.mrb[0].mxu0
        %864 = vmatprep.mubr.f32.mxu0 0.0
        %865 = vmatmul.mubr.f32.gmra.mrb[0].mxu0 %v740
        %v866 = vpop.f32.mrb[0].mxu0
        %v867 = vadd.f32 0.0, %v866
        %v868 = vpop.f32.mrb[0].mxu0
        %869 = vmatprep.mubr.f32.mxu0 0.0
        %870 = vmatmul.mubr.f32.gmra.mrb[0].mxu0 %v741
        %v871 = vpop.f32.mrb[0].mxu0
        %v872 = vadd.f32 0.0, %v871
        %v873 = vpop.f32.mrb[0].mxu0
        %874 = vmatprep.mubr.f32.mxu0 0.0
        %875 = vmatmul.mubr.f32.gmra.mrb[0].mxu0 %v742
        %v876 = vpop.f32.mrb[0].mxu0
        %v877 = vadd.f32 0.0, %v876
        %v878 = vpop.f32.mrb[0].mxu0
        %879 = vmatprep.mubr.f32.mxu0 0.0
        %880 = vmatmul.mubr.f32.gmra.mrb[0].mxu0 %v743
        %v881 = vpop.f32.mrb[0].mxu0
        %v882 = vadd.f32 0.0, %v881
        %v883 = vpop.f32.mrb[0].mxu0
        %884 = vmatprep.mubr.f32.mxu0 0.0
        %885 = vmatmul.mubr.f32.gmra.mrb[0].mxu0 %v744
        %v886 = vpop.f32.mrb[0].mxu0
        %v887 = vadd.f32 0.0, %v886
        %v888 = vpop.f32.mrb[0].mxu0
        %889 = vdwg.mxu0
        %v890 = vmul.f32 %v812, 0.001
        %v891 = vmul.f32 %v817, 0.001
        %v892 = vmul.f32 %v822, 0.001
        %v893 = vmul.f32 %v827, 0.001
        %v894 = vmul.f32 %v832, 0.001
        %v895 = vmul.f32 %v837, 0.001
        %v896 = vmul.f32 %v842, 0.001
        %v897 = vmul.f32 %v847, 0.001
        %v898 = vmul.f32 %v852, 0.001
        %v899 = vmul.f32 %v857, 0.001
        %v900 = vmul.f32 %v862, 0.001
        %v901 = vmul.f32 %v867, 0.001
        %v902 = vmul.f32 %v872, 0.001
        %v903 = vmul.f32 %v877, 0.001
        %v904 = vmul.f32 %v882, 0.001
        %v905 = vmul.f32 %v887, 0.001
        %v906 = vadd.f32 %v475, %v890
        %v907 = vadd.f32 %v480, %v891
        %v908 = vadd.f32 %v485, %v892
        %v909 = vadd.f32 %v490, %v893
        %v910 = vadd.f32 %v495, %v894
        %v911 = vadd.f32 %v500, %v895
        %v912 = vadd.f32 %v505, %v896
        %v913 = vadd.f32 %v510, %v897
        %v914 = vadd.f32 %v515, %v898
        %v915 = vadd.f32 %v520, %v899
        %v916 = vadd.f32 %v525, %v900
        %v917 = vadd.f32 %v530, %v901
        %v918 = vadd.f32 %v535, %v902
        %v919 = vadd.f32 %v540, %v903
        %v920 = vadd.f32 %v545, %v904
        %v921 = vadd.f32 %v550, %v905
        %v922 = vxor.u32 %v906, 2147483648
        %v923 = vxor.u32 %v907, 2147483648
        %v924 = vxor.u32 %v908, 2147483648
        %v925 = vxor.u32 %v909, 2147483648
        %v926 = vxor.u32 %v910, 2147483648
        %v927 = vxor.u32 %v911, 2147483648
        %v928 = vxor.u32 %v912, 2147483648
        %v929 = vxor.u32 %v913, 2147483648
        %v930 = vxor.u32 %v914, 2147483648
        %v931 = vxor.u32 %v915, 2147483648
        %v932 = vxor.u32 %v916, 2147483648
        %v933 = vxor.u32 %v917, 2147483648
        %v934 = vxor.u32 %v918, 2147483648
        %v935 = vxor.u32 %v919, 2147483648
        %v936 = vxor.u32 %v920, 2147483648
        %v937 = vxor.u32 %v921, 2147483648
        %v938 = vmul.f32 %v922, 1.442695
        %v939 = vpow.pop %v938
        %v940 = vmul.f32 %v923, 1.442695
        %v941 = vpow.pop %v940
        %v942 = vmul.f32 %v924, 1.442695
        %v943 = vpow.pop %v942
        %v944 = vmul.f32 %v925, 1.442695
        %v945 = vpow.pop %v944
        %v946 = vmul.f32 %v926, 1.442695
        %v947 = vpow.pop %v946
        %v948 = vmul.f32 %v927, 1.442695
        %v949 = vpow.pop %v948
        %v950 = vmul.f32 %v928, 1.442695
        %v951 = vpow.pop %v950
        %v952 = vmul.f32 %v929, 1.442695
        %v953 = vpow.pop %v952
        %v954 = vmul.f32 %v930, 1.442695
        %v955 = vpow.pop %v954
        %v956 = vmul.f32 %v931, 1.442695
        %v957 = vpow.pop %v956
        %v958 = vmul.f32 %v932, 1.442695
        %v959 = vpow.pop %v958
        %v960 = vmul.f32 %v933, 1.442695
        %v961 = vpow.pop %v960
        %v962 = vmul.f32 %v934, 1.442695
        %v963 = vpow.pop %v962
        %v964 = vmul.f32 %v935, 1.442695
        %v965 = vpow.pop %v964
        %v966 = vmul.f32 %v936, 1.442695
        %v967 = vpow.pop %v966
        %v968 = vmul.f32 %v937, 1.442695
        %v969 = vpow.pop %v968
        %v970 = vadd.f32 %v939, 1.0
        %v971 = vadd.f32 %v941, 1.0
        %v972 = vadd.f32 %v943, 1.0
        %v973 = vadd.f32 %v945, 1.0
        %v974 = vadd.f32 %v947, 1.0
        %v975 = vadd.f32 %v949, 1.0
        %v976 = vadd.f32 %v951, 1.0
        %v977 = vadd.f32 %v953, 1.0
        %v978 = vadd.f32 %v955, 1.0
        %v979 = vadd.f32 %v957, 1.0
        %v980 = vadd.f32 %v959, 1.0
        %v981 = vadd.f32 %v961, 1.0
        %v982 = vadd.f32 %v963, 1.0
        %v983 = vadd.f32 %v965, 1.0
        %v984 = vadd.f32 %v967, 1.0
        %v985 = vadd.f32 %v969, 1.0
        %v986 = vrcp.pop %v970
        %v987 = vmul.f32 1.0, %v986
        %v988 = vrcp.pop %v971
        %v989 = vmul.f32 1.0, %v988
        %v990 = vrcp.pop %v972
        %v991 = vmul.f32 1.0, %v990
        %v992 = vrcp.pop %v973
        %v993 = vmul.f32 1.0, %v992
        %v994 = vrcp.pop %v974
        %v995 = vmul.f32 1.0, %v994
        %v996 = vrcp.pop %v975
        %v997 = vmul.f32 1.0, %v996
        %v998 = vrcp.pop %v976
        %v999 = vmul.f32 1.0, %v998
        %v1000 = vrcp.pop %v977
        %v1001 = vmul.f32 1.0, %v1000
        %v1002 = vrcp.pop %v978
        %v1003 = vmul.f32 1.0, %v1002
        %v1004 = vrcp.pop %v979
        %v1005 = vmul.f32 1.0, %v1004
        %v1006 = vrcp.pop %v980
        %v1007 = vmul.f32 1.0, %v1006
        %v1008 = vrcp.pop %v981
        %v1009 = vmul.f32 1.0, %v1008
        %v1010 = vrcp.pop %v982
        %v1011 = vmul.f32 1.0, %v1010
        %v1012 = vrcp.pop %v983
        %v1013 = vmul.f32 1.0, %v1012
        %v1014 = vrcp.pop %v984
        %v1015 = vmul.f32 1.0, %v1014
        %v1016 = vrcp.pop %v985
        %v1017 = vmul.f32 1.0, %v1016
        %v1018 = vsub.f32 %v987, %v618
        %v1019 = vsub.f32 %v989, %v620
        %v1020 = vsub.f32 %v991, %v622
        %v1021 = vsub.f32 %v993, %v624
        %v1022 = vsub.f32 %v995, %v626
        %v1023 = vsub.f32 %v997, %v628
        %v1024 = vsub.f32 %v999, %v630
        %v1025 = vsub.f32 %v1001, %v632
        %v1026 = vsub.f32 %v1003, %v634
        %v1027 = vsub.f32 %v1005, %v636
        %v1028 = vsub.f32 %v1007, %v638
        %v1029 = vsub.f32 %v1009, %v640
        %v1030 = vsub.f32 %v1011, %v642
        %v1031 = vsub.f32 %v1013, %v644
        %v1032 = vsub.f32 %v1015, %v646
        %v1033 = vsub.f32 %v1017, %v648
        %v1034 = vmul.f32 %v1018, 0.00012207031
        %v1035 = vmul.f32 %v1019, 0.00012207031
        %v1036 = vmul.f32 %v1020, 0.00012207031
        %v1037 = vmul.f32 %v1021, 0.00012207031
        %v1038 = vmul.f32 %v1022, 0.00012207031
        %v1039 = vmul.f32 %v1023, 0.00012207031
        %v1040 = vmul.f32 %v1024, 0.00012207031
        %v1041 = vmul.f32 %v1025, 0.00012207031
        %v1042 = vmul.f32 %v1026, 0.00012207031
        %v1043 = vmul.f32 %v1027, 0.00012207031
        %v1044 = vmul.f32 %v1028, 0.00012207031
        %v1045 = vmul.f32 %v1029, 0.00012207031
        %v1046 = vmul.f32 %v1030, 0.00012207031
        %v1047 = vmul.f32 %v1031, 0.00012207031
        %v1048 = vmul.f32 %v1032, 0.00012207031
        %v1049 = vmul.f32 %v1033, 0.00012207031
        %1050 = vmatprep.subr.mxu0 0.0
        %1051 = vmatpush1.msra.mxu0 %v385
        %1052 = vmatprep.subr.mxu0 0.0
        %1053 = vmatpush1.msra.mxu0 %v386
        %1054 = vmatprep.subr.mxu0 0.0
        %1055 = vmatpush1.msra.mxu0 %v387
        %1056 = vmatprep.subr.mxu0 0.0
        %1057 = vmatpush1.msra.mxu0 %v388
        %1058 = vmatprep.subr.mxu0 0.0
        %1059 = vmatpush1.msra.mxu0 %v389
        %1060 = vmatprep.subr.mxu0 0.0
        %1061 = vmatpush1.msra.mxu0 %v390
        %1062 = vmatprep.subr.mxu0 0.0
        %1063 = vmatpush1.msra.mxu0 %v391
        %1064 = vmatprep.subr.mxu0 0.0
        %1065 = vmatpush1.msra.mxu0 %v392
        %1066 = vmatprep.subr.mxu0 0.0
        %1067 = vmatpush1.msra.mxu0 %v393
        %1068 = vmatprep.subr.mxu0 0.0
        %1069 = vmatpush1.msra.mxu0 %v394
        %1070 = vmatprep.subr.mxu0 0.0
        %1071 = vmatpush1.msra.mxu0 %v395
        %1072 = vmatprep.subr.mxu0 0.0
        %1073 = vmatpush1.msra.mxu0 %v396
        %1074 = vmatprep.subr.mxu0 0.0
        %1075 = vmatpush1.msra.mxu0 %v397
        %1076 = vmatprep.subr.mxu0 0.0
        %1077 = vmatpush1.msra.mxu0 %v398
        %1078 = vmatprep.subr.mxu0 0.0
        %1079 = vmatpush1.msra.mxu0 %v399
        %1080 = vmatprep.subr.mxu0 0.0
        %1081 = vmatpush1.msra.mxu0 %v400
        %1082 = vmatprep.subr.mxu0 0.0
        %1083 = vmatpush1.msra.mxu0 0.0
        %1084 = vmatprep.subr.mxu0 0.0
        %1085 = vmatpush1.msra.mxu0 0.0
        %1086 = vmatprep.subr.mxu0 0.0
        %1087 = vmatpush1.msra.mxu0 0.0
        %1088 = vmatprep.subr.mxu0 0.0
        %1089 = vmatpush1.msra.mxu0 0.0
        %1090 = vmatprep.subr.mxu0 0.0
        %1091 = vmatpush1.msra.mxu0 0.0
        %1092 = vmatprep.subr.mxu0 0.0
        %1093 = vmatpush1.msra.mxu0 0.0
        %1094 = vmatprep.subr.mxu0 0.0
        %1095 = vmatpush1.msra.mxu0 0.0
        %1096 = vmatprep.subr.mxu0 0.0
        %1097 = vmatpush1.msra.mxu0 0.0
        %1098 = vmatprep.subr.mxu0 0.0
        %1099 = vmatpush1.msra.mxu0 0.0
        %1100 = vmatprep.subr.mxu0 0.0
        %1101 = vmatpush1.msra.mxu0 0.0
        %1102 = vmatprep.subr.mxu0 0.0
        %1103 = vmatpush1.msra.mxu0 0.0
        %1104 = vmatprep.subr.mxu0 0.0
        %1105 = vmatpush1.msra.mxu0 0.0
        %1106 = vmatprep.subr.mxu0 0.0
        %1107 = vmatpush1.msra.mxu0 0.0
        %1108 = vmatprep.subr.mxu0 0.0
        %1109 = vmatpush1.msra.mxu0 0.0
        %1110 = vmatprep.subr.mxu0 0.0
        %1111 = vmatpush1.msra.mxu0 0.0
        %1112 = vmatprep.subr.mxu0 0.0
        %1113 = vmatpush1.msra.mxu0 0.0
        %1114 = vmatprep.mubr.f32.mxu0 0.0
        %1115 = vmatmul.mubr.f32.gmra.mrb[0].mxu0 %v1034
        %v1116 = vpop.f32.mrb[0].mxu0
        %v1117 = vadd.f32 0.0, %v1116
        %v1118 = vpop.f32.mrb[0].mxu0
        %1119 = vmatprep.mubr.f32.mxu0 0.0
        %1120 = vmatmul.mubr.f32.gmra.mrb[0].mxu0 %v1035
        %v1121 = vpop.f32.mrb[0].mxu0
        %v1122 = vadd.f32 0.0, %v1121
        %v1123 = vpop.f32.mrb[0].mxu0
        %1124 = vmatprep.mubr.f32.mxu0 0.0
        %1125 = vmatmul.mubr.f32.gmra.mrb[0].mxu0 %v1036
        %v1126 = vpop.f32.mrb[0].mxu0
        %v1127 = vadd.f32 0.0, %v1126
        %v1128 = vpop.f32.mrb[0].mxu0
        %1129 = vmatprep.mubr.f32.mxu0 0.0
        %1130 = vmatmul.mubr.f32.gmra.mrb[0].mxu0 %v1037
        %v1131 = vpop.f32.mrb[0].mxu0
        %v1132 = vadd.f32 0.0, %v1131
        %v1133 = vpop.f32.mrb[0].mxu0
        %1134 = vmatprep.mubr.f32.mxu0 0.0
        %1135 = vmatmul.mubr.f32.gmra.mrb[0].mxu0 %v1038
        %v1136 = vpop.f32.mrb[0].mxu0
        %v1137 = vadd.f32 0.0, %v1136
        %v1138 = vpop.f32.mrb[0].mxu0
        %1139 = vmatprep.mubr.f32.mxu0 0.0
        %1140 = vmatmul.mubr.f32.gmra.mrb[0].mxu0 %v1039
        %v1141 = vpop.f32.mrb[0].mxu0
        %v1142 = vadd.f32 0.0, %v1141
        %v1143 = vpop.f32.mrb[0].mxu0
        %1144 = vmatprep.mubr.f32.mxu0 0.0
        %1145 = vmatmul.mubr.f32.gmra.mrb[0].mxu0 %v1040
        %v1146 = vpop.f32.mrb[0].mxu0
        %v1147 = vadd.f32 0.0, %v1146
        %v1148 = vpop.f32.mrb[0].mxu0
        %1149 = vmatprep.mubr.f32.mxu0 0.0
        %1150 = vmatmul.mubr.f32.gmra.mrb[0].mxu0 %v1041
        %v1151 = vpop.f32.mrb[0].mxu0
        %v1152 = vadd.f32 0.0, %v1151
        %v1153 = vpop.f32.mrb[0].mxu0
        %1154 = vmatprep.mubr.f32.mxu0 0.0
        %1155 = vmatmul.mubr.f32.gmra.mrb[0].mxu0 %v1042
        %v1156 = vpop.f32.mrb[0].mxu0
        %v1157 = vadd.f32 0.0, %v1156
        %v1158 = vpop.f32.mrb[0].mxu0
        %1159 = vmatprep.mubr.f32.mxu0 0.0
        %1160 = vmatmul.mubr.f32.gmra.mrb[0].mxu0 %v1043
        %v1161 = vpop.f32.mrb[0].mxu0
        %v1162 = vadd.f32 0.0, %v1161
        %v1163 = vpop.f32.mrb[0].mxu0
        %1164 = vmatprep.mubr.f32.mxu0 0.0
        %1165 = vmatmul.mubr.f32.gmra.mrb[0].mxu0 %v1044
        %v1166 = vpop.f32.mrb[0].mxu0
        %v1167 = vadd.f32 0.0, %v1166
        %v1168 = vpop.f32.mrb[0].mxu0
        %1169 = vmatprep.mubr.f32.mxu0 0.0
        %1170 = vmatmul.mubr.f32.gmra.mrb[0].mxu0 %v1045
        %v1171 = vpop.f32.mrb[0].mxu0
        %v1172 = vadd.f32 0.0, %v1171
        %v1173 = vpop.f32.mrb[0].mxu0
        %1174 = vmatprep.mubr.f32.mxu0 0.0
        %1175 = vmatmul.mubr.f32.gmra.mrb[0].mxu0 %v1046
        %v1176 = vpop.f32.mrb[0].mxu0
        %v1177 = vadd.f32 0.0, %v1176
        %v1178 = vpop.f32.mrb[0].mxu0
        %1179 = vmatprep.mubr.f32.mxu0 0.0
        %1180 = vmatmul.mubr.f32.gmra.mrb[0].mxu0 %v1047
        %v1181 = vpop.f32.mrb[0].mxu0
        %v1182 = vadd.f32 0.0, %v1181
        %v1183 = vpop.f32.mrb[0].mxu0
        %1184 = vmatprep.mubr.f32.mxu0 0.0
        %1185 = vmatmul.mubr.f32.gmra.mrb[0].mxu0 %v1048
        %v1186 = vpop.f32.mrb[0].mxu0
        %v1187 = vadd.f32 0.0, %v1186
        %v1188 = vpop.f32.mrb[0].mxu0
        %1189 = vmatprep.mubr.f32.mxu0 0.0
        %1190 = vmatmul.mubr.f32.gmra.mrb[0].mxu0 %v1049
        %v1191 = vpop.f32.mrb[0].mxu0
        %v1192 = vadd.f32 0.0, %v1191
        %v1193 = vpop.f32.mrb[0].mxu0
        %1194 = vdwg.mxu0
        %v1195 = vmul.f32 %v1117, %v649
        %v1196 = vmul.f32 %v1122, %v650
        %v1197 = vmul.f32 %v1127, %v651
        %v1198 = vmul.f32 %v1132, %v652
        %v1199 = vmul.f32 %v1137, %v653
        %v1200 = vmul.f32 %v1142, %v654
        %v1201 = vmul.f32 %v1147, %v655
        %v1202 = vmul.f32 %v1152, %v656
        %v1203 = vmul.f32 %v1157, %v657
        %v1204 = vmul.f32 %v1162, %v658
        %v1205 = vmul.f32 %v1167, %v659
        %v1206 = vmul.f32 %v1172, %v660
        %v1207 = vmul.f32 %v1177, %v661
        %v1208 = vmul.f32 %v1182, %v662
        %v1209 = vmul.f32 %v1187, %v663
        %v1210 = vmul.f32 %v1192, %v664
        %1211 = vadd.xlane.f32.xlu0 %v1195
        %v1212 = vpop.xlane.xlu0 %1211
        %1213 = vadd.xlane.f32.xlu0 %v1196
        %v1214 = vpop.xlane.xlu0 %1213
        %1215 = vadd.xlane.f32.xlu0 %v1197
        %v1216 = vpop.xlane.xlu0 %1215
        %1217 = vadd.xlane.f32.xlu0 %v1198
        %v1218 = vpop.xlane.xlu0 %1217
        %1219 = vadd.xlane.f32.xlu0 %v1199
        %v1220 = vpop.xlane.xlu0 %1219
        %1221 = vadd.xlane.f32.xlu0 %v1200
        %v1222 = vpop.xlane.xlu0 %1221
        %1223 = vadd.xlane.f32.xlu0 %v1201
        %v1224 = vpop.xlane.xlu0 %1223
        %1225 = vadd.xlane.f32.xlu0 %v1202
        %v1226 = vpop.xlane.xlu0 %1225
        %1227 = vadd.xlane.f32.xlu0 %v1203
        %v1228 = vpop.xlane.xlu0 %1227
        %1229 = vadd.xlane.f32.xlu0 %v1204
        %v1230 = vpop.xlane.xlu0 %1229
        %1231 = vadd.xlane.f32.xlu0 %v1205
        %v1232 = vpop.xlane.xlu0 %1231
        %1233 = vadd.xlane.f32.xlu0 %v1206
        %v1234 = vpop.xlane.xlu0 %1233
        %1235 = vadd.xlane.f32.xlu0 %v1207
        %v1236 = vpop.xlane.xlu0 %1235
        %1237 = vadd.xlane.f32.xlu0 %v1208
        %v1238 = vpop.xlane.xlu0 %1237
        %1239 = vadd.xlane.f32.xlu0 %v1209
        %v1240 = vpop.xlane.xlu0 %1239
        %1241 = vadd.xlane.f32.xlu0 %v1210
        %v1242 = vpop.xlane.xlu0 %1241
        %v1243 = vmul.f32 %v1117, %v713
        %v1244 = vmul.f32 %v1122, %v714
        %v1245 = vmul.f32 %v1127, %v715
        %v1246 = vmul.f32 %v1132, %v716
        %v1247 = vmul.f32 %v1137, %v717
        %v1248 = vmul.f32 %v1142, %v718
        %v1249 = vmul.f32 %v1147, %v719
        %v1250 = vmul.f32 %v1152, %v720
        %v1251 = vmul.f32 %v1157, %v721
        %v1252 = vmul.f32 %v1162, %v722
        %v1253 = vmul.f32 %v1167, %v723
        %v1254 = vmul.f32 %v1172, %v724
        %v1255 = vmul.f32 %v1177, %v725
        %v1256 = vmul.f32 %v1182, %v726
        %v1257 = vmul.f32 %v1187, %v727
        %v1258 = vmul.f32 %v1192, %v728
        %v1259 = vmul.f32 %v1212, %v713
        %v1260 = vmul.f32 %v1214, %v714
        %v1261 = vmul.f32 %v1216, %v715
        %v1262 = vmul.f32 %v1218, %v716
        %v1263 = vmul.f32 %v1220, %v717
        %v1264 = vmul.f32 %v1222, %v718
        %v1265 = vmul.f32 %v1224, %v719
        %v1266 = vmul.f32 %v1226, %v720
        %v1267 = vmul.f32 %v1228, %v721
        %v1268 = vmul.f32 %v1230, %v722
        %v1269 = vmul.f32 %v1232, %v723
        %v1270 = vmul.f32 %v1234, %v724
        %v1271 = vmul.f32 %v1236, %v725
        %v1272 = vmul.f32 %v1238, %v726
        %v1273 = vmul.f32 %v1240, %v727
        %v1274 = vmul.f32 %v1242, %v728
        %v1275 = vmul.f32 %v1259, %v713
        %v1276 = vmul.f32 %v1260, %v714
        %v1277 = vmul.f32 %v1261, %v715
        %v1278 = vmul.f32 %v1262, %v716
        %v1279 = vmul.f32 %v1263, %v717
        %v1280 = vmul.f32 %v1264, %v718
        %v1281 = vmul.f32 %v1265, %v719
        %v1282 = vmul.f32 %v1266, %v720
        %v1283 = vmul.f32 %v1267, %v721
        %v1284 = vmul.f32 %v1268, %v722
        %v1285 = vmul.f32 %v1269, %v723
        %v1286 = vmul.f32 %v1270, %v724
        %v1287 = vmul.f32 %v1271, %v725
        %v1288 = vmul.f32 %v1272, %v726
        %v1289 = vmul.f32 %v1273, %v727
        %v1290 = vmul.f32 %v1274, %v728
        %v1291 = vmul.f32 %v1275, %v713
        %v1292 = vmul.f32 %v1276, %v714
        %v1293 = vmul.f32 %v1277, %v715
        %v1294 = vmul.f32 %v1278, %v716
        %v1295 = vmul.f32 %v1279, %v717
        %v1296 = vmul.f32 %v1280, %v718
        %v1297 = vmul.f32 %v1281, %v719
        %v1298 = vmul.f32 %v1282, %v720
        %v1299 = vmul.f32 %v1283, %v721
        %v1300 = vmul.f32 %v1284, %v722
        %v1301 = vmul.f32 %v1285, %v723
        %v1302 = vmul.f32 %v1286, %v724
        %v1303 = vmul.f32 %v1287, %v725
        %v1304 = vmul.f32 %v1288, %v726
        %v1305 = vmul.f32 %v1289, %v727
        %v1306 = vmul.f32 %v1290, %v728
        %v1307 = vmul.f32 %v649, %v1291
        %v1308 = vmul.f32 %v650, %v1292
        %v1309 = vmul.f32 %v651, %v1293
        %v1310 = vmul.f32 %v652, %v1294
        %v1311 = vmul.f32 %v653, %v1295
        %v1312 = vmul.f32 %v654, %v1296
        %v1313 = vmul.f32 %v655, %v1297
        %v1314 = vmul.f32 %v656, %v1298
        %v1315 = vmul.f32 %v657, %v1299
        %v1316 = vmul.f32 %v658, %v1300
        %v1317 = vmul.f32 %v659, %v1301
        %v1318 = vmul.f32 %v660, %v1302
        %v1319 = vmul.f32 %v661, %v1303
        %v1320 = vmul.f32 %v662, %v1304
        %v1321 = vmul.f32 %v663, %v1305
        %v1322 = vmul.f32 %v664, %v1306
        %v1323 = vsub.f32 %v1243, %v1307
        %v1324 = vsub.f32 %v1244, %v1308
        %v1325 = vsub.f32 %v1245, %v1309
        %v1326 = vsub.f32 %v1246, %v1310
        %v1327 = vsub.f32 %v1247, %v1311
        %v1328 = vsub.f32 %v1248, %v1312
        %v1329 = vsub.f32 %v1249, %v1313
        %v1330 = vsub.f32 %v1250, %v1314
        %v1331 = vsub.f32 %v1251, %v1315
        %v1332 = vsub.f32 %v1252, %v1316
        %v1333 = vsub.f32 %v1253, %v1317
        %v1334 = vsub.f32 %v1254, %v1318
        %v1335 = vsub.f32 %v1255, %v1319
        %v1336 = vsub.f32 %v1256, %v1320
        %v1337 = vsub.f32 %v1257, %v1321
        %v1338 = vsub.f32 %v1258, %v1322
        %v1339 = vmul.f32 %v1323, 0.001
        %v1340 = vmul.f32 %v1324, 0.001
        %v1341 = vmul.f32 %v1325, 0.001
        %v1342 = vmul.f32 %v1326, 0.001
        %v1343 = vmul.f32 %v1327, 0.001
        %v1344 = vmul.f32 %v1328, 0.001
        %v1345 = vmul.f32 %v1329, 0.001
        %v1346 = vmul.f32 %v1330, 0.001
        %v1347 = vmul.f32 %v1331, 0.001
        %v1348 = vmul.f32 %v1332, 0.001
        %v1349 = vmul.f32 %v1333, 0.001
        %v1350 = vmul.f32 %v1334, 0.001
        %v1351 = vmul.f32 %v1335, 0.001
        %v1352 = vmul.f32 %v1336, 0.001
        %v1353 = vmul.f32 %v1337, 0.001
        %v1354 = vmul.f32 %v1338, 0.001
        %v1355 = vmul.f32 %v1339, %v1339
        %v1356 = vmul.f32 %v1340, %v1340
        %v1357 = vmul.f32 %v1341, %v1341
        %v1358 = vmul.f32 %v1342, %v1342
        %v1359 = vmul.f32 %v1343, %v1343
        %v1360 = vmul.f32 %v1344, %v1344
        %v1361 = vmul.f32 %v1345, %v1345
        %v1362 = vmul.f32 %v1346, %v1346
        %v1363 = vmul.f32 %v1347, %v1347
        %v1364 = vmul.f32 %v1348, %v1348
        %v1365 = vmul.f32 %v1349, %v1349
        %v1366 = vmul.f32 %v1350, %v1350
        %v1367 = vmul.f32 %v1351, %v1351
        %v1368 = vmul.f32 %v1352, %v1352
        %v1369 = vmul.f32 %v1353, %v1353
        %v1370 = vmul.f32 %v1354, %v1354
        %1371 = vadd.xlane.f32.xlu0 %v1355
        %v1372 = vpop.xlane.xlu0 %1371
        %1373 = vadd.xlane.f32.xlu0 %v1356
        %v1374 = vpop.xlane.xlu0 %1373
        %1375 = vadd.xlane.f32.xlu0 %v1357
        %v1376 = vpop.xlane.xlu0 %1375
        %1377 = vadd.xlane.f32.xlu0 %v1358
        %v1378 = vpop.xlane.xlu0 %1377
        %1379 = vadd.xlane.f32.xlu0 %v1359
        %v1380 = vpop.xlane.xlu0 %1379
        %1381 = vadd.xlane.f32.xlu0 %v1360
        %v1382 = vpop.xlane.xlu0 %1381
        %1383 = vadd.xlane.f32.xlu0 %v1361
        %v1384 = vpop.xlane.xlu0 %1383
        %1385 = vadd.xlane.f32.xlu0 %v1362
        %v1386 = vpop.xlane.xlu0 %1385
        %1387 = vadd.xlane.f32.xlu0 %v1363
        %v1388 = vpop.xlane.xlu0 %1387
        %1389 = vadd.xlane.f32.xlu0 %v1364
        %v1390 = vpop.xlane.xlu0 %1389
        %1391 = vadd.xlane.f32.xlu0 %v1365
        %v1392 = vpop.xlane.xlu0 %1391
        %1393 = vadd.xlane.f32.xlu0 %v1366
        %v1394 = vpop.xlane.xlu0 %1393
        %1395 = vadd.xlane.f32.xlu0 %v1367
        %v1396 = vpop.xlane.xlu0 %1395
        %1397 = vadd.xlane.f32.xlu0 %v1368
        %v1398 = vpop.xlane.xlu0 %1397
        %1399 = vadd.xlane.f32.xlu0 %v1369
        %v1400 = vpop.xlane.xlu0 %1399
        %1401 = vadd.xlane.f32.xlu0 %v1370
        %v1402 = vpop.xlane.xlu0 %1401
        %v1403 = vrsqrt.pop %v1372
        %v1404 = vrsqrt.pop %v1374
        %v1405 = vrsqrt.pop %v1376
        %v1406 = vrsqrt.pop %v1378
        %v1407 = vrsqrt.pop %v1380
        %v1408 = vrsqrt.pop %v1382
        %v1409 = vrsqrt.pop %v1384
        %v1410 = vrsqrt.pop %v1386
        %v1411 = vrsqrt.pop %v1388
        %v1412 = vrsqrt.pop %v1390
        %v1413 = vrsqrt.pop %v1392
        %v1414 = vrsqrt.pop %v1394
        %v1415 = vrsqrt.pop %v1396
        %v1416 = vrsqrt.pop %v1398
        %v1417 = vrsqrt.pop %v1400
        %v1418 = vrsqrt.pop %v1402
        %v1419 = vmul.f32 %v1403, %v1339
        %v1420 = vmul.f32 %v1404, %v1340
        %v1421 = vmul.f32 %v1405, %v1341
        %v1422 = vmul.f32 %v1406, %v1342
        %v1423 = vmul.f32 %v1407, %v1343
        %v1424 = vmul.f32 %v1408, %v1344
        %v1425 = vmul.f32 %v1409, %v1345
        %v1426 = vmul.f32 %v1410, %v1346
        %v1427 = vmul.f32 %v1411, %v1347
        %v1428 = vmul.f32 %v1412, %v1348
        %v1429 = vmul.f32 %v1413, %v1349
        %v1430 = vmul.f32 %v1414, %v1350
        %v1431 = vmul.f32 %v1415, %v1351
        %v1432 = vmul.f32 %v1416, %v1352
        %v1433 = vmul.f32 %v1417, %v1353
        %v1434 = vmul.f32 %v1418, %v1354
        %1435 = vst [vmem:[%s342] sm:$0xff] %v1419
        %1436 = vst [vmem:[%s342 + $0x8] sm:$0xff] %v1420
        %1437 = vst [vmem:[%s342 + $0x10] sm:$0xff] %v1421
        %1438 = vst [vmem:[%s342 + $0x18] sm:$0xff] %v1422
        %1439 = vst [vmem:[%s342 + $0x20] sm:$0xff] %v1423
        %1440 = vst [vmem:[%s342 + $0x28] sm:$0xff] %v1424
        %1441 = vst [vmem:[%s342 + $0x30] sm:$0xff] %v1425
        %1442 = vst [vmem:[%s342 + $0x38] sm:$0xff] %v1426
        %1443 = vst [vmem:[%s342 + $0x40] sm:$0xff] %v1427
        %1444 = vst [vmem:[%s342 + $0x48] sm:$0xff] %v1428
        %1445 = vst [vmem:[%s342 + $0x50] sm:$0xff] %v1429
        %1446 = vst [vmem:[%s342 + $0x58] sm:$0xff] %v1430
        %1447 = vst [vmem:[%s342 + $0x60] sm:$0xff] %v1431
        %1448 = vst [vmem:[%s342 + $0x68] sm:$0xff] %v1432
        %1449 = vst [vmem:[%s342 + $0x70] sm:$0xff] %v1433
        %1450 = vst [vmem:[%s342 + $0x78] sm:$0xff] %v1434
        %1451 = vmatprep.subr.mxu0 0.0
        %1452 = vmatpush1.msra.mxu0 %v369
        %1453 = vmatprep.subr.mxu0 0.0
        %1454 = vmatpush1.msra.mxu0 %v370
        %1455 = vmatprep.subr.mxu0 0.0
        %1456 = vmatpush1.msra.mxu0 %v371
        %1457 = vmatprep.subr.mxu0 0.0
        %1458 = vmatpush1.msra.mxu0 %v372
        %1459 = vmatprep.subr.mxu0 0.0
        %1460 = vmatpush1.msra.mxu0 %v373
        %1461 = vmatprep.subr.mxu0 0.0
        %1462 = vmatpush1.msra.mxu0 %v374
        %1463 = vmatprep.subr.mxu0 0.0
        %1464 = vmatpush1.msra.mxu0 %v375
        %1465 = vmatprep.subr.mxu0 0.0
        %1466 = vmatpush1.msra.mxu0 %v376
        %1467 = vmatprep.subr.mxu0 0.0
        %1468 = vmatpush1.msra.mxu0 %v377
        %1469 = vmatprep.subr.mxu0 0.0
        %1470 = vmatpush1.msra.mxu0 %v378
        %1471 = vmatprep.subr.mxu0 0.0
        %1472 = vmatpush1.msra.mxu0 %v379
        %1473 = vmatprep.subr.mxu0 0.0
        %1474 = vmatpush1.msra.mxu0 %v380
        %1475 = vmatprep.subr.mxu0 0.0
        %1476 = vmatpush1.msra.mxu0 %v381
        %1477 = vmatprep.subr.mxu0 0.0
        %1478 = vmatpush1.msra.mxu0 %v382
        %1479 = vmatprep.subr.mxu0 0.0
        %1480 = vmatpush1.msra.mxu0 %v383
        %1481 = vmatprep.subr.mxu0 0.0
        %1482 = vmatpush1.msra.mxu0 %v384
        %1483 = vmatprep.subr.mxu0 0.0
        %1484 = vmatpush1.msra.mxu0 0.0
        %1485 = vmatprep.subr.mxu0 0.0
        %1486 = vmatpush1.msra.mxu0 0.0
        %1487 = vmatprep.subr.mxu0 0.0
        %1488 = vmatpush1.msra.mxu0 0.0
        %1489 = vmatprep.subr.mxu0 0.0
        %1490 = vmatpush1.msra.mxu0 0.0
        %1491 = vmatprep.subr.mxu0 0.0
        %1492 = vmatpush1.msra.mxu0 0.0
        %1493 = vmatprep.subr.mxu0 0.0
        %1494 = vmatpush1.msra.mxu0 0.0
        %1495 = vmatprep.subr.mxu0 0.0
        %1496 = vmatpush1.msra.mxu0 0.0
        %1497 = vmatprep.subr.mxu0 0.0
        %1498 = vmatpush1.msra.mxu0 0.0
        %1499 = vmatprep.subr.mxu0 0.0
        %1500 = vmatpush1.msra.mxu0 0.0
        %1501 = vmatprep.subr.mxu0 0.0
        %1502 = vmatpush1.msra.mxu0 0.0
        %1503 = vmatprep.subr.mxu0 0.0
        %1504 = vmatpush1.msra.mxu0 0.0
        %1505 = vmatprep.subr.mxu0 0.0
        %1506 = vmatpush1.msra.mxu0 0.0
        %1507 = vmatprep.subr.mxu0 0.0
        %1508 = vmatpush1.msra.mxu0 0.0
        %1509 = vmatprep.subr.mxu0 0.0
        %1510 = vmatpush1.msra.mxu0 0.0
        %1511 = vmatprep.subr.mxu0 0.0
        %1512 = vmatpush1.msra.mxu0 0.0
        %1513 = vmatprep.subr.mxu0 0.0
        %1514 = vmatpush1.msra.mxu0 0.0
        %1515 = vmatprep.mubr.f32.mxu0 0.0
        %1516 = vmatmul.mubr.f32.gmra.mrb[0].mxu0 %v1419
        %v1517 = vpop.f32.mrb[0].mxu0
        %v1518 = vadd.f32 0.0, %v1517
        %v1519 = vpop.f32.mrb[0].mxu0
        %1520 = vmatprep.mubr.f32.mxu0 0.0
        %1521 = vmatmul.mubr.f32.gmra.mrb[0].mxu0 %v1420
        %v1522 = vpop.f32.mrb[0].mxu0
        %v1523 = vadd.f32 0.0, %v1522
        %v1524 = vpop.f32.mrb[0].mxu0
        %1525 = vmatprep.mubr.f32.mxu0 0.0
        %1526 = vmatmul.mubr.f32.gmra.mrb[0].mxu0 %v1421
        %v1527 = vpop.f32.mrb[0].mxu0
        %v1528 = vadd.f32 0.0, %v1527
        %v1529 = vpop.f32.mrb[0].mxu0
        %1530 = vmatprep.mubr.f32.mxu0 0.0
        %1531 = vmatmul.mubr.f32.gmra.mrb[0].mxu0 %v1422
        %v1532 = vpop.f32.mrb[0].mxu0
        %v1533 = vadd.f32 0.0, %v1532
        %v1534 = vpop.f32.mrb[0].mxu0
        %1535 = vmatprep.mubr.f32.mxu0 0.0
        %1536 = vmatmul.mubr.f32.gmra.mrb[0].mxu0 %v1423
        %v1537 = vpop.f32.mrb[0].mxu0
        %v1538 = vadd.f32 0.0, %v1537
        %v1539 = vpop.f32.mrb[0].mxu0
        %1540 = vmatprep.mubr.f32.mxu0 0.0
        %1541 = vmatmul.mubr.f32.gmra.mrb[0].mxu0 %v1424
        %v1542 = vpop.f32.mrb[0].mxu0
        %v1543 = vadd.f32 0.0, %v1542
        %v1544 = vpop.f32.mrb[0].mxu0
        %1545 = vmatprep.mubr.f32.mxu0 0.0
        %1546 = vmatmul.mubr.f32.gmra.mrb[0].mxu0 %v1425
        %v1547 = vpop.f32.mrb[0].mxu0
        %v1548 = vadd.f32 0.0, %v1547
        %v1549 = vpop.f32.mrb[0].mxu0
        %1550 = vmatprep.mubr.f32.mxu0 0.0
        %1551 = vmatmul.mubr.f32.gmra.mrb[0].mxu0 %v1426
        %v1552 = vpop.f32.mrb[0].mxu0
        %v1553 = vadd.f32 0.0, %v1552
        %v1554 = vpop.f32.mrb[0].mxu0
        %1555 = vmatprep.mubr.f32.mxu0 0.0
        %1556 = vmatmul.mubr.f32.gmra.mrb[0].mxu0 %v1427
        %v1557 = vpop.f32.mrb[0].mxu0
        %v1558 = vadd.f32 0.0, %v1557
        %v1559 = vpop.f32.mrb[0].mxu0
        %1560 = vmatprep.mubr.f32.mxu0 0.0
        %1561 = vmatmul.mubr.f32.gmra.mrb[0].mxu0 %v1428
        %v1562 = vpop.f32.mrb[0].mxu0
        %v1563 = vadd.f32 0.0, %v1562
        %v1564 = vpop.f32.mrb[0].mxu0
        %1565 = vmatprep.mubr.f32.mxu0 0.0
        %1566 = vmatmul.mubr.f32.gmra.mrb[0].mxu0 %v1429
        %v1567 = vpop.f32.mrb[0].mxu0
        %v1568 = vadd.f32 0.0, %v1567
        %v1569 = vpop.f32.mrb[0].mxu0
        %1570 = vmatprep.mubr.f32.mxu0 0.0
        %1571 = vmatmul.mubr.f32.gmra.mrb[0].mxu0 %v1430
        %v1572 = vpop.f32.mrb[0].mxu0
        %v1573 = vadd.f32 0.0, %v1572
        %v1574 = vpop.f32.mrb[0].mxu0
        %1575 = vmatprep.mubr.f32.mxu0 0.0
        %1576 = vmatmul.mubr.f32.gmra.mrb[0].mxu0 %v1431
        %v1577 = vpop.f32.mrb[0].mxu0
        %v1578 = vadd.f32 0.0, %v1577
        %v1579 = vpop.f32.mrb[0].mxu0
        %1580 = vmatprep.mubr.f32.mxu0 0.0
        %1581 = vmatmul.mubr.f32.gmra.mrb[0].mxu0 %v1432
        %v1582 = vpop.f32.mrb[0].mxu0
        %v1583 = vadd.f32 0.0, %v1582
        %v1584 = vpop.f32.mrb[0].mxu0
        %1585 = vmatprep.mubr.f32.mxu0 0.0
        %1586 = vmatmul.mubr.f32.gmra.mrb[0].mxu0 %v1433
        %v1587 = vpop.f32.mrb[0].mxu0
        %v1588 = vadd.f32 0.0, %v1587
        %v1589 = vpop.f32.mrb[0].mxu0
        %1590 = vmatprep.mubr.f32.mxu0 0.0
        %1591 = vmatmul.mubr.f32.gmra.mrb[0].mxu0 %v1434
        %v1592 = vpop.f32.mrb[0].mxu0
        %v1593 = vadd.f32 0.0, %v1592
        %v1594 = vpop.f32.mrb[0].mxu0
        %1595 = vdwg.mxu0
        %v1596 = vadd.f32 %v475, %v1518
        %v1597 = vadd.f32 %v480, %v1523
        %v1598 = vadd.f32 %v485, %v1528
        %v1599 = vadd.f32 %v490, %v1533
        %v1600 = vadd.f32 %v495, %v1538
        %v1601 = vadd.f32 %v500, %v1543
        %v1602 = vadd.f32 %v505, %v1548
        %v1603 = vadd.f32 %v510, %v1553
        %v1604 = vadd.f32 %v515, %v1558
        %v1605 = vadd.f32 %v520, %v1563
        %v1606 = vadd.f32 %v525, %v1568
        %v1607 = vadd.f32 %v530, %v1573
        %v1608 = vadd.f32 %v535, %v1578
        %v1609 = vadd.f32 %v540, %v1583
        %v1610 = vadd.f32 %v545, %v1588
        %v1611 = vadd.f32 %v550, %v1593
        %v1612 = vxor.u32 %v1596, 2147483648
        %v1613 = vxor.u32 %v1597, 2147483648
        %v1614 = vxor.u32 %v1598, 2147483648
        %v1615 = vxor.u32 %v1599, 2147483648
        %v1616 = vxor.u32 %v1600, 2147483648
        %v1617 = vxor.u32 %v1601, 2147483648
        %v1618 = vxor.u32 %v1602, 2147483648
        %v1619 = vxor.u32 %v1603, 2147483648
        %v1620 = vxor.u32 %v1604, 2147483648
        %v1621 = vxor.u32 %v1605, 2147483648
        %v1622 = vxor.u32 %v1606, 2147483648
        %v1623 = vxor.u32 %v1607, 2147483648
        %v1624 = vxor.u32 %v1608, 2147483648
        %v1625 = vxor.u32 %v1609, 2147483648
        %v1626 = vxor.u32 %v1610, 2147483648
        %v1627 = vxor.u32 %v1611, 2147483648
        %v1628 = vmul.f32 %v1612, 1.442695
        %v1629 = vpow.pop %v1628
        %v1630 = vmul.f32 %v1613, 1.442695
        %v1631 = vpow.pop %v1630
        %v1632 = vmul.f32 %v1614, 1.442695
        %v1633 = vpow.pop %v1632
        %v1634 = vmul.f32 %v1615, 1.442695
        %v1635 = vpow.pop %v1634
        %v1636 = vmul.f32 %v1616, 1.442695
        %v1637 = vpow.pop %v1636
        %v1638 = vmul.f32 %v1617, 1.442695
        %v1639 = vpow.pop %v1638
        %v1640 = vmul.f32 %v1618, 1.442695
        %v1641 = vpow.pop %v1640
        %v1642 = vmul.f32 %v1619, 1.442695
        %v1643 = vpow.pop %v1642
        %v1644 = vmul.f32 %v1620, 1.442695
        %v1645 = vpow.pop %v1644
        %v1646 = vmul.f32 %v1621, 1.442695
        %v1647 = vpow.pop %v1646
        %v1648 = vmul.f32 %v1622, 1.442695
        %v1649 = vpow.pop %v1648
        %v1650 = vmul.f32 %v1623, 1.442695
        %v1651 = vpow.pop %v1650
        %v1652 = vmul.f32 %v1624, 1.442695
        %v1653 = vpow.pop %v1652
        %v1654 = vmul.f32 %v1625, 1.442695
        %v1655 = vpow.pop %v1654
        %v1656 = vmul.f32 %v1626, 1.442695
        %v1657 = vpow.pop %v1656
        %v1658 = vmul.f32 %v1627, 1.442695
        %v1659 = vpow.pop %v1658
        %v1660 = vadd.f32 %v1629, 1.0
        %v1661 = vadd.f32 %v1631, 1.0
        %v1662 = vadd.f32 %v1633, 1.0
        %v1663 = vadd.f32 %v1635, 1.0
        %v1664 = vadd.f32 %v1637, 1.0
        %v1665 = vadd.f32 %v1639, 1.0
        %v1666 = vadd.f32 %v1641, 1.0
        %v1667 = vadd.f32 %v1643, 1.0
        %v1668 = vadd.f32 %v1645, 1.0
        %v1669 = vadd.f32 %v1647, 1.0
        %v1670 = vadd.f32 %v1649, 1.0
        %v1671 = vadd.f32 %v1651, 1.0
        %v1672 = vadd.f32 %v1653, 1.0
        %v1673 = vadd.f32 %v1655, 1.0
        %v1674 = vadd.f32 %v1657, 1.0
        %v1675 = vadd.f32 %v1659, 1.0
        %v1676 = vrcp.pop %v1660
        %v1677 = vmul.f32 1.0, %v1676
        %v1678 = vrcp.pop %v1661
        %v1679 = vmul.f32 1.0, %v1678
        %v1680 = vrcp.pop %v1662
        %v1681 = vmul.f32 1.0, %v1680
        %v1682 = vrcp.pop %v1663
        %v1683 = vmul.f32 1.0, %v1682
        %v1684 = vrcp.pop %v1664
        %v1685 = vmul.f32 1.0, %v1684
        %v1686 = vrcp.pop %v1665
        %v1687 = vmul.f32 1.0, %v1686
        %v1688 = vrcp.pop %v1666
        %v1689 = vmul.f32 1.0, %v1688
        %v1690 = vrcp.pop %v1667
        %v1691 = vmul.f32 1.0, %v1690
        %v1692 = vrcp.pop %v1668
        %v1693 = vmul.f32 1.0, %v1692
        %v1694 = vrcp.pop %v1669
        %v1695 = vmul.f32 1.0, %v1694
        %v1696 = vrcp.pop %v1670
        %v1697 = vmul.f32 1.0, %v1696
        %v1698 = vrcp.pop %v1671
        %v1699 = vmul.f32 1.0, %v1698
        %v1700 = vrcp.pop %v1672
        %v1701 = vmul.f32 1.0, %v1700
        %v1702 = vrcp.pop %v1673
        %v1703 = vmul.f32 1.0, %v1702
        %v1704 = vrcp.pop %v1674
        %v1705 = vmul.f32 1.0, %v1704
        %v1706 = vrcp.pop %v1675
        %v1707 = vmul.f32 1.0, %v1706
        %v1708 = vlog2.pop %v1677
        %v1709 = vmul.f32 %v1708, 0.6931472
        %v1710 = vlog2.pop %v1679
        %v1711 = vmul.f32 %v1710, 0.6931472
        %v1712 = vlog2.pop %v1681
        %v1713 = vmul.f32 %v1712, 0.6931472
        %v1714 = vlog2.pop %v1683
        %v1715 = vmul.f32 %v1714, 0.6931472
        %v1716 = vlog2.pop %v1685
        %v1717 = vmul.f32 %v1716, 0.6931472
        %v1718 = vlog2.pop %v1687
        %v1719 = vmul.f32 %v1718, 0.6931472
        %v1720 = vlog2.pop %v1689
        %v1721 = vmul.f32 %v1720, 0.6931472
        %v1722 = vlog2.pop %v1691
        %v1723 = vmul.f32 %v1722, 0.6931472
        %v1724 = vlog2.pop %v1693
        %v1725 = vmul.f32 %v1724, 0.6931472
        %v1726 = vlog2.pop %v1695
        %v1727 = vmul.f32 %v1726, 0.6931472
        %v1728 = vlog2.pop %v1697
        %v1729 = vmul.f32 %v1728, 0.6931472
        %v1730 = vlog2.pop %v1699
        %v1731 = vmul.f32 %v1730, 0.6931472
        %v1732 = vlog2.pop %v1701
        %v1733 = vmul.f32 %v1732, 0.6931472
        %v1734 = vlog2.pop %v1703
        %v1735 = vmul.f32 %v1734, 0.6931472
        %v1736 = vlog2.pop %v1705
        %v1737 = vmul.f32 %v1736, 0.6931472
        %v1738 = vlog2.pop %v1707
        %v1739 = vmul.f32 %v1738, 0.6931472
        %v1740 = vmax.f32 %v1709, -100.0
        %v1741 = vmax.f32 %v1711, -100.0
        %v1742 = vmax.f32 %v1713, -100.0
        %v1743 = vmax.f32 %v1715, -100.0
        %v1744 = vmax.f32 %v1717, -100.0
        %v1745 = vmax.f32 %v1719, -100.0
        %v1746 = vmax.f32 %v1721, -100.0
        %v1747 = vmax.f32 %v1723, -100.0
        %v1748 = vmax.f32 %v1725, -100.0
        %v1749 = vmax.f32 %v1727, -100.0
        %v1750 = vmax.f32 %v1729, -100.0
        %v1751 = vmax.f32 %v1731, -100.0
        %v1752 = vmax.f32 %v1733, -100.0
        %v1753 = vmax.f32 %v1735, -100.0
        %v1754 = vmax.f32 %v1737, -100.0
        %v1755 = vmax.f32 %v1739, -100.0
        %v1756 = vsub.f32 1.0, %v1677
        %v1757 = vsub.f32 1.0, %v1679
        %v1758 = vsub.f32 1.0, %v1681
        %v1759 = vsub.f32 1.0, %v1683
        %v1760 = vsub.f32 1.0, %v1685
        %v1761 = vsub.f32 1.0, %v1687
        %v1762 = vsub.f32 1.0, %v1689
        %v1763 = vsub.f32 1.0, %v1691
        %v1764 = vsub.f32 1.0, %v1693
        %v1765 = vsub.f32 1.0, %v1695
        %v1766 = vsub.f32 1.0, %v1697
        %v1767 = vsub.f32 1.0, %v1699
        %v1768 = vsub.f32 1.0, %v1701
        %v1769 = vsub.f32 1.0, %v1703
        %v1770 = vsub.f32 1.0, %v1705
        %v1771 = vsub.f32 1.0, %v1707
        %v1772 = vlog2.pop %v1756
        %v1773 = vmul.f32 %v1772, 0.6931472
        %v1774 = vlog2.pop %v1757
        %v1775 = vmul.f32 %v1774, 0.6931472
        %v1776 = vlog2.pop %v1758
        %v1777 = vmul.f32 %v1776, 0.6931472
        %v1778 = vlog2.pop %v1759
        %v1779 = vmul.f32 %v1778, 0.6931472
        %v1780 = vlog2.pop %v1760
        %v1781 = vmul.f32 %v1780, 0.6931472
        %v1782 = vlog2.pop %v1761
        %v1783 = vmul.f32 %v1782, 0.6931472
        %v1784 = vlog2.pop %v1762
        %v1785 = vmul.f32 %v1784, 0.6931472
        %v1786 = vlog2.pop %v1763
        %v1787 = vmul.f32 %v1786, 0.6931472
        %v1788 = vlog2.pop %v1764
        %v1789 = vmul.f32 %v1788, 0.6931472
        %v1790 = vlog2.pop %v1765
        %v1791 = vmul.f32 %v1790, 0.6931472
        %v1792 = vlog2.pop %v1766
        %v1793 = vmul.f32 %v1792, 0.6931472
        %v1794 = vlog2.pop %v1767
        %v1795 = vmul.f32 %v1794, 0.6931472
        %v1796 = vlog2.pop %v1768
        %v1797 = vmul.f32 %v1796, 0.6931472
        %v1798 = vlog2.pop %v1769
        %v1799 = vmul.f32 %v1798, 0.6931472
        %v1800 = vlog2.pop %v1770
        %v1801 = vmul.f32 %v1800, 0.6931472
        %v1802 = vlog2.pop %v1771
        %v1803 = vmul.f32 %v1802, 0.6931472
        %v1804 = vmax.f32 %v1773, -100.0
        %v1805 = vmax.f32 %v1775, -100.0
        %v1806 = vmax.f32 %v1777, -100.0
        %v1807 = vmax.f32 %v1779, -100.0
        %v1808 = vmax.f32 %v1781, -100.0
        %v1809 = vmax.f32 %v1783, -100.0
        %v1810 = vmax.f32 %v1785, -100.0
        %v1811 = vmax.f32 %v1787, -100.0
        %v1812 = vmax.f32 %v1789, -100.0
        %v1813 = vmax.f32 %v1791, -100.0
        %v1814 = vmax.f32 %v1793, -100.0
        %v1815 = vmax.f32 %v1795, -100.0
        %v1816 = vmax.f32 %v1797, -100.0
        %v1817 = vmax.f32 %v1799, -100.0
        %v1818 = vmax.f32 %v1801, -100.0
        %v1819 = vmax.f32 %v1803, -100.0
        %v1820 = vmul.f32 %v618, %v1740
        %v1821 = vmul.f32 %v620, %v1741
        %v1822 = vmul.f32 %v622, %v1742
        %v1823 = vmul.f32 %v624, %v1743
        %v1824 = vmul.f32 %v626, %v1744
        %v1825 = vmul.f32 %v628, %v1745
        %v1826 = vmul.f32 %v630, %v1746
        %v1827 = vmul.f32 %v632, %v1747
        %v1828 = vmul.f32 %v634, %v1748
        %v1829 = vmul.f32 %v636, %v1749
        %v1830 = vmul.f32 %v638, %v1750
        %v1831 = vmul.f32 %v640, %v1751
        %v1832 = vmul.f32 %v642, %v1752
        %v1833 = vmul.f32 %v644, %v1753
        %v1834 = vmul.f32 %v646, %v1754
        %v1835 = vmul.f32 %v648, %v1755
        %v1836 = vsub.f32 1.0, %v618
        %v1837 = vsub.f32 1.0, %v620
        %v1838 = vsub.f32 1.0, %v622
        %v1839 = vsub.f32 1.0, %v624
        %v1840 = vsub.f32 1.0, %v626
        %v1841 = vsub.f32 1.0, %v628
        %v1842 = vsub.f32 1.0, %v630
        %v1843 = vsub.f32 1.0, %v632
        %v1844 = vsub.f32 1.0, %v634
        %v1845 = vsub.f32 1.0, %v636
        %v1846 = vsub.f32 1.0, %v638
        %v1847 = vsub.f32 1.0, %v640
        %v1848 = vsub.f32 1.0, %v642
        %v1849 = vsub.f32 1.0, %v644
        %v1850 = vsub.f32 1.0, %v646
        %v1851 = vsub.f32 1.0, %v648
        %v1852 = vmul.f32 %v1836, %v1804
        %v1853 = vmul.f32 %v1837, %v1805
        %v1854 = vmul.f32 %v1838, %v1806
        %v1855 = vmul.f32 %v1839, %v1807
        %v1856 = vmul.f32 %v1840, %v1808
        %v1857 = vmul.f32 %v1841, %v1809
        %v1858 = vmul.f32 %v1842, %v1810
        %v1859 = vmul.f32 %v1843, %v1811
        %v1860 = vmul.f32 %v1844, %v1812
        %v1861 = vmul.f32 %v1845, %v1813
        %v1862 = vmul.f32 %v1846, %v1814
        %v1863 = vmul.f32 %v1847, %v1815
        %v1864 = vmul.f32 %v1848, %v1816
        %v1865 = vmul.f32 %v1849, %v1817
        %v1866 = vmul.f32 %v1850, %v1818
        %v1867 = vmul.f32 %v1851, %v1819
        %v1868 = vadd.f32 %v1820, %v1852
        %v1869 = vadd.f32 %v1821, %v1853
        %v1870 = vadd.f32 %v1822, %v1854
        %v1871 = vadd.f32 %v1823, %v1855
        %v1872 = vadd.f32 %v1824, %v1856
        %v1873 = vadd.f32 %v1825, %v1857
        %v1874 = vadd.f32 %v1826, %v1858
        %v1875 = vadd.f32 %v1827, %v1859
        %v1876 = vadd.f32 %v1828, %v1860
        %v1877 = vadd.f32 %v1829, %v1861
        %v1878 = vadd.f32 %v1830, %v1862
        %v1879 = vadd.f32 %v1831, %v1863
        %v1880 = vadd.f32 %v1832, %v1864
        %v1881 = vadd.f32 %v1833, %v1865
        %v1882 = vadd.f32 %v1834, %v1866
        %v1883 = vadd.f32 %v1835, %v1867
        %v1884 = vsub.f32 0.0, %v1868
        %v1885 = vsub.f32 0.0, %v1869
        %v1886 = vsub.f32 0.0, %v1870
        %v1887 = vsub.f32 0.0, %v1871
        %v1888 = vsub.f32 0.0, %v1872
        %v1889 = vsub.f32 0.0, %v1873
        %v1890 = vsub.f32 0.0, %v1874
        %v1891 = vsub.f32 0.0, %v1875
        %v1892 = vsub.f32 0.0, %v1876
        %v1893 = vsub.f32 0.0, %v1877
        %v1894 = vsub.f32 0.0, %v1878
        %v1895 = vsub.f32 0.0, %v1879
        %v1896 = vsub.f32 0.0, %v1880
        %v1897 = vsub.f32 0.0, %v1881
        %v1898 = vsub.f32 0.0, %v1882
        %v1899 = vsub.f32 0.0, %v1883
        %s1900 = smul.u32 %s31, 128
        %v1901 = vlaneseq
        %v1902 = vshrl.u32 %v1901, 7
        %v1903 = vadd.s32 %v1902, 8
        %v1904 = vadd.s32 %v1902, 16
        %v1905 = vadd.s32 %v1902, 24
        %v1906 = vadd.s32 %v1902, 32
        %v1907 = vadd.s32 %v1902, 40
        %v1908 = vadd.s32 %v1902, 48
        %v1909 = vadd.s32 %v1902, 56
        %v1910 = vadd.s32 %v1902, 64
        %v1911 = vadd.s32 %v1902, 72
        %v1912 = vadd.s32 %v1902, 80
        %v1913 = vadd.s32 %v1902, 88
        %v1914 = vadd.s32 %v1902, 96
        %v1915 = vadd.s32 %v1902, 104
        %v1916 = vadd.s32 %v1902, 112
        %v1917 = vadd.s32 %v1902, 120
        %v1918 = vstv %s1900
        %v1919 = vadd.s32 %v1918, %v1902
        %v1920 = vadd.s32 %v1918, %v1903
        %v1921 = vadd.s32 %v1918, %v1904
        %v1922 = vadd.s32 %v1918, %v1905
        %v1923 = vadd.s32 %v1918, %v1906
        %v1924 = vadd.s32 %v1918, %v1907
        %v1925 = vadd.s32 %v1918, %v1908
        %v1926 = vadd.s32 %v1918, %v1909
        %v1927 = vadd.s32 %v1918, %v1910
        %v1928 = vadd.s32 %v1918, %v1911
        %v1929 = vadd.s32 %v1918, %v1912
        %v1930 = vadd.s32 %v1918, %v1913
        %v1931 = vadd.s32 %v1918, %v1914
        %v1932 = vadd.s32 %v1918, %v1915
        %v1933 = vadd.s32 %v1918, %v1916
        %v1934 = vadd.s32 %v1918, %v1917
        %v1935 = vlaneseq
        %v1936 = vand.u32 %v1935, 127
        %vm1937 = vcmp.lt.s32.totalorder %v1919, 256
        %vm1938 = vcmp.lt.s32.totalorder %v1920, 256
        %vm1939 = vcmp.lt.s32.totalorder %v1921, 256
        %vm1940 = vcmp.lt.s32.totalorder %v1922, 256
        %vm1941 = vcmp.lt.s32.totalorder %v1923, 256
        %vm1942 = vcmp.lt.s32.totalorder %v1924, 256
        %vm1943 = vcmp.lt.s32.totalorder %v1925, 256
        %vm1944 = vcmp.lt.s32.totalorder %v1926, 256
        %vm1945 = vcmp.lt.s32.totalorder %v1927, 256
        %vm1946 = vcmp.lt.s32.totalorder %v1928, 256
        %vm1947 = vcmp.lt.s32.totalorder %v1929, 256
        %vm1948 = vcmp.lt.s32.totalorder %v1930, 256
        %vm1949 = vcmp.lt.s32.totalorder %v1931, 256
        %vm1950 = vcmp.lt.s32.totalorder %v1932, 256
        %vm1951 = vcmp.lt.s32.totalorder %v1933, 256
        %vm1952 = vcmp.lt.s32.totalorder %v1934, 256
        %vm1953 = vcmp.lt.s32.totalorder %v1936, 32
        %vm1954 = vmand %vm1937, %vm1953
        %vm1955 = vmand %vm1938, %vm1953
        %vm1956 = vmand %vm1939, %vm1953
        %vm1957 = vmand %vm1940, %vm1953
        %vm1958 = vmand %vm1941, %vm1953
        %vm1959 = vmand %vm1942, %vm1953
        %vm1960 = vmand %vm1943, %vm1953
        %vm1961 = vmand %vm1944, %vm1953
        %vm1962 = vmand %vm1945, %vm1953
        %vm1963 = vmand %vm1946, %vm1953
        %vm1964 = vmand %vm1947, %vm1953
        %vm1965 = vmand %vm1948, %vm1953
        %vm1966 = vmand %vm1949, %vm1953
        %vm1967 = vmand %vm1950, %vm1953
        %vm1968 = vmand %vm1951, %vm1953
        %vm1969 = vmand %vm1952, %vm1953
        %v1970 = vsel %vm1954, %v1884, 0.0
        %v1971 = vsel %vm1955, %v1885, 0.0
        %v1972 = vsel %vm1956, %v1886, 0.0
        %v1973 = vsel %vm1957, %v1887, 0.0
        %v1974 = vsel %vm1958, %v1888, 0.0
        %v1975 = vsel %vm1959, %v1889, 0.0
        %v1976 = vsel %vm1960, %v1890, 0.0
        %v1977 = vsel %vm1961, %v1891, 0.0
        %v1978 = vsel %vm1962, %v1892, 0.0
        %v1979 = vsel %vm1963, %v1893, 0.0
        %v1980 = vsel %vm1964, %v1894, 0.0
        %v1981 = vsel %vm1965, %v1895, 0.0
        %v1982 = vsel %vm1966, %v1896, 0.0
        %v1983 = vsel %vm1967, %v1897, 0.0
        %v1984 = vsel %vm1968, %v1898, 0.0
        %v1985 = vsel %vm1969, %v1899, 0.0
        %v1986 = vadd.f32 %v1970, %v1971
        %v1987 = vadd.f32 %v1986, %v1972
        %v1988 = vadd.f32 %v1987, %v1973
        %v1989 = vadd.f32 %v1988, %v1974
        %v1990 = vadd.f32 %v1989, %v1975
        %v1991 = vadd.f32 %v1990, %v1976
        %v1992 = vadd.f32 %v1991, %v1977
        %v1993 = vadd.f32 %v1992, %v1978
        %v1994 = vadd.f32 %v1993, %v1979
        %v1995 = vadd.f32 %v1994, %v1980
        %v1996 = vadd.f32 %v1995, %v1981
        %v1997 = vadd.f32 %v1996, %v1982
        %v1998 = vadd.f32 %v1997, %v1983
        %v1999 = vadd.f32 %v1998, %v1984
        %v2000 = vadd.f32 %v1999, %v1985
        %2001 = vadd.xlane.f32.xlu0 %v2000
        %v2002 = vpop.xlane.xlu0 %2001
        %v2003 = vrot.slane %v2002, 4
        %v2004 = vadd.f32 %v2002, %v2003
        %v2005 = vrot.slane %v2004, 2
        %v2006 = vadd.f32 %v2004, %v2005
        %v2007 = vrot.slane %v2006, 1
        %v2008 = vadd.f32 %v2006, %v2007
        %s2009 = vtos %v2008
        %vm2010 = vcmp.eq.s32.totalorder %v1902, 0
        %vm2011 = vcmp.eq.s32.totalorder %v1936, 0
        %vm2012 = vmand %vm2010, %vm2011
        %v2013 = vstv %s2009
        %v2014 = vsel %vm2012, %v2013, 0.0
        %2015 = vst [vmem:[%s349] sm:$0xff] %v2014
        %s2016 = sand.u32 %s154, 1
        %s2017 = scalar_lea.sflag [#allocation4], %s2016
        %s2018 = sand.u32 %s154, 1
        %s2019 = smul.addr %s2018, 128
        %s2020 = scalar_lea.vmem [#allocation10], %s2019
        %s2021 = sand.u32 %s180, 1
        %s2022 = scalar_lea.sflag [#allocation12], %s2021
        %s2023 = sand.u32 %s180, 1
        %s2024 = smul.addr %s2023, 8
        %s2025 = scalar_lea.vmem [#allocation11], %s2024
        // Predicated region
        $region57: #{tpu_custom_call.1} parent=39 // pred_check
          %p2026 = pneg %p164
        $region58: #{tpu_custom_call.1} parent=39 // pred_check_branch
          %2028 = sbr.rel (%p2026) target = $region60
        $region59: #{tpu_custom_call.1} parent=39 // pred_region
          %s2029 = smul.u32 16, %s31
          %s2031 = ssub.s32 2048, 2048
          %2032 = vsyncadd %s2017, %s2031
          %s2033 = smul.addr %s2029, 128
          %s2034 = scalar_lea.hbm %s5, %s2033
          %s2035 = sshll.u32 %s2020, 4
          %s2036 = int_to_ptr.vmem [resolvable:$true] %s2035
          %2041 = dma.vmem_to_hbm [thread:$0]  %s2036, 2048, %s2034, %s2017, 128, 128, 8
        $region60: #{tpu_custom_call.1} parent=39 // pred_fallthru
          _
        // Predicated region
        $region61: #{tpu_custom_call.1} parent=39 // pred_check
          %p2042 = pneg %p190
        $region62: #{tpu_custom_call.1} parent=39 // pred_check_branch
          %2044 = sbr.rel (%p2042) target = $region64
        $region63: #{tpu_custom_call.1} parent=39 // pred_region
          %s2046 = ssub.s32 128, 128
          %2047 = vsyncadd %s2022, %s2046
          %s2048 = smul.addr %s31, 128
          %s2049 = scalar_lea.hbm %s6, %s2048
          %s2051 = sshll.u32 %s2025, 4
          %s2052 = int_to_ptr.vmem [resolvable:$true] %s2051
          %2054 = dma.vmem_to_hbm [thread:$0]  %s2052, 128, %s2049, %s2022
        $region64: #{tpu_custom_call.1} parent=39 // pred_fallthru
          _
      $region40: #{tpu_custom_call.1} parent=5 // pred_fallthru
        _
      %p2055 = scmp.le.s32.totalorder 2, %s26
      // Predicated region
      $region65: #{tpu_custom_call.1} parent=5 // pred_check
        %p2056 = pneg %p2055
      $region66: #{tpu_custom_call.1} parent=5 // pred_check_branch
        %2058 = sbr.rel (%p2056) target = $region68
      $region67: #{tpu_custom_call.1} parent=5 // pred_region
        %s2059 = ssub.s32 %s26, 2
        // Predicated region
        $region69: #{tpu_custom_call.1} parent=67 // pred_check
          %p2060 = pneg %p170
        $region70: #{tpu_custom_call.1} parent=67 // pred_check_branch
          %2062 = sbr.rel (%p2060) target = $region72
        $region71: #{tpu_custom_call.1} parent=67 // pred_region
          %s2063 = sand.u32 %s155, 1
          %s2064 = scalar_lea.sflag [#allocation4], %s2063
          %s2065 = sand.u32 %s155, 1
          %s2066 = smul.addr %s2065, 128
          %s2067 = scalar_lea.vmem [#allocation10], %s2066
          %2068 = dma.done %s2064, 2048
        $region72: #{tpu_custom_call.1} parent=67 // pred_fallthru
          _
        // Predicated region
        $region73: #{tpu_custom_call.1} parent=67 // pred_check
          %p2069 = pneg %p196
        $region74: #{tpu_custom_call.1} parent=67 // pred_check_branch
          %2071 = sbr.rel (%p2069) target = $region76
        $region75: #{tpu_custom_call.1} parent=67 // pred_region
          %s2072 = sand.u32 %s181, 1
          %s2073 = scalar_lea.sflag [#allocation12], %s2072
          %s2074 = sand.u32 %s181, 1
          %s2075 = smul.addr %s2074, 8
          %s2076 = scalar_lea.vmem [#allocation11], %s2075
          %2077 = dma.done %s2073, 128
        $region76: #{tpu_custom_call.1} parent=67 // pred_fallthru
          _
      $region68: #{tpu_custom_call.1} parent=5 // pred_fallthru
        _
    $region6: #{tpu_custom_call.1} parent=1 // loop_footer
      %s30 = sadd.s32 1, %s26
    $region7: #{tpu_custom_call.1} parent=1 // loop_footer_branch
      %25 = sbr.rel target = $region3
    $region8: #{tpu_custom_call.1} parent=1 // loop_exit
      _
    %2078 = vsyncpa [#allocation3], 1
    %s2079 = scalar_lea.sflag [#allocation3], 1
    %2080 = vsyncpa %s2079, 1
    %2081 = vsyncpa [#allocation6], 1
    %s2082 = scalar_lea.sflag [#allocation6], 1
    %2083 = vsyncpa %s2082, 1
    %2084 = vsyncpa [#allocation9], 1
    %2085 = vsyncpa [#allocation4], 1
    %s2086 = scalar_lea.sflag [#allocation4], 1
    %2087 = vsyncpa %s2086, 1
    %2088 = vsyncpa [#allocation12], 1
    %s2089 = scalar_lea.sflag [#allocation12], 1
    %2090 = vsyncpa %s2089, 1

</llo_original>
